<compile_context>
chip_gen: v6e
topology: v6e:2x2x1
jax: 0.10.0
libtpu: 0.0.40
codegen_flags: <defaults>
</compile_context>

<pallas_src>
import numpy as np
import jax
import jax.numpy as jnp
from jax.experimental import pallas as pl
from jax.experimental.pallas import tpu as pltpu

# -----------------------------------------------------------------------------
# Synthetic CAD-vocabulary constants (deterministic, defined in-script).
# TODO(synk): real N_PRIM_COMMANDS / PARAM_DIM / PRIM_PARAM_MASK / EOS_IDX come
# from the project's CAD vocabulary definition; synthesized here.
N_PRIM_COMMANDS = 4
PARAM_DIM = 32
N_ARGS = 8
N_CMD = N_PRIM_COMMANDS + 2           # +SOS, +EOS
EOS_IDX = N_CMD - 1                   # last command index is EOS
_NUM_ARGS_PER_CMD = [2, 4, 8, 6, 0, 0]  # EOS / SOL take no params
PRIM_PARAM_MASK = np.array(
    [[1.0 if j < _NUM_ARGS_PER_CMD[c] else 0.0 for j in range(N_ARGS)]
     for c in range(N_CMD)], dtype=np.float32)

TILE_ROWS = 4096      # packed rows (x128 lanes) per grid step; sweep up to 8192
SENTINEL = 128.0      # target-code sentinel: >=128 => no lane match, mask=0


# -----------------------------------------------------------------------------
# Pallas kernel: lane-packed masked cross-entropy partial-sum accumulator.
#
# Packed layout: each packed row of 128 lanes holds g = 128 // cp logical rows
# of cp (power-of-two) classes.  Metadata is one f32 code per logical row:
# the global lane index of its target (seg*cp + target) if kept, SENTINEL if
# dropped.
def _make_masked_ce_kernel(t_blk, gcols, nrows, has_tail):
    def kernel(x_ref, t_ref, seg_ind_ref, bcast_ref,
               out_pick_ref, out_lse_ref, acc_pick, acc_lse):
        i = pl.program_id(0)

        @pl.when(i == 0)
        def _init():
            acc_pick[...] = jnp.zeros_like(acc_pick)
            acc_lse[...] = jnp.zeros_like(acc_lse)

        x = x_ref[...].astype(jnp.float32)          # (T, 128)
        t_code = t_ref[...]                          # (T, gcols) f32
        T = x.shape[0]

        if has_tail:
            # Only the final block can read past nrows: keep garbage (possibly
            # NaN) out of the max/exp/log chain and neutralize its codes.
            rem = nrows - i * t_blk
            row = jax.lax.broadcasted_iota(jnp.int32, (T, 1), 0)
            valid = row < rem
            x = jnp.where(valid, x, 0.0)
            t_code = jnp.where(valid, t_code, SENTINEL)

        # Shared per-packed-row max (single XLU cross-lane reduce per vreg).
        m_row = jnp.max(x, axis=-1, keepdims=True)                  # (T, 1)
        e = jnp.exp(x - m_row)                                      # (T, 128)

        # Per-segment sum of exp on the (otherwise idle) MXU.
        ssum = jnp.dot(e, seg_ind_ref[...],
                       precision=jax.lax.Precision.HIGHEST,
                       preferred_element_type=jnp.float32)          # (T, gcols)
        lse = m_row + jnp.log(jnp.maximum(ssum, 1e-30))             # (T, gcols)
        acc_lse[...] += jnp.where(t_code < 128.0, lse, 0.0)

        # Picked-logit term: broadcast each segment's target lane index across
        # its cp lanes via the MXU, then one compare + one select on the VPU.
        # Sentinel codes (>=128) never match a lane -> masked rows contribute 0.
        t_lane = jnp.dot(t_code, bcast_ref[...],
                         precision=jax.lax.Precision.HIGHEST,
                         preferred_element_type=jnp.float32)        # (T, 128)
        lane = jax.lax.broadcasted_iota(jnp.int32, (1, 128), 1).astype(jnp.float32)
        acc_pick[...] += jnp.where(lane == t_lane, x, 0.0)

        @pl.when(i == pl.num_programs(0) - 1)
        def _finalize():
            out_pick_ref[...] = jnp.sum(acc_pick[...], axis=0, keepdims=True)
            out_lse_ref[...] = jnp.sum(acc_lse[...], axis=0, keepdims=True)

    return kernel


def masked_ce_sum_pallas(logits, targets, mask):
    """sum over rows of mask * CE(logits_row, target_row) via the packed kernel."""
    C = logits.shape[-1]
    if C > 128:
        raise NotImplementedError("masked_ce_sum_pallas supports <= 128 classes")
    cp = 1
    while cp < C:
        cp *= 2                       # pad class dim to a power of two
    g = 128 // cp                     # logical rows per 128-lane packed row
    gcols = max(g, 8)                 # metadata columns (sublane-friendly pad)

    lead = logits.shape[:-1]
    N = int(np.prod(lead)) if lead else 1
    x = logits.reshape(N, C)          # NO dtype cast here (cast in-kernel)
    t = targets.reshape(N).astype(jnp.int32)
    m = mask.reshape(N)

    # Class padding: no-op for the 32-wide param logits (C == cp).
    if cp != C:
        x = jnp.pad(x, ((0, 0), (0, cp - C)), constant_values=-1e30)

    # Row padding so the packed slab row count is sublane-aligned.  For this
    # module (N = B*S*N_ARGS, g=4) it never triggers, keeping the big slab a
    # pure metadata reshape.
    row_pad = (-N) % (g * 8)
    if row_pad:
        x = jnp.pad(x, ((0, row_pad), (0, 0)))
        t = jnp.pad(t, ((0, row_pad),))
        m = jnp.pad(m, ((0, row_pad),))
    Np = N + row_pad
    nrows = Np // g

    xp = x.reshape(nrows, 128)        # lane-dense slab: free contiguous reshape

    # Fold target + (binary) mask into one f32 code per logical row.
    seg_off = (jnp.arange(g, dtype=jnp.int32) * cp)[None, :]
    t2 = t.reshape(nrows, g)
    m2 = m.reshape(nrows, g)
    code = jnp.where(m2 > 0, (t2 + seg_off).astype(jnp.float32),
                     jnp.float32(SENTINEL))
    if gcols > g:
        code = jnp.pad(code, ((0, 0), (0, gcols - g)), constant_values=SENTINEL)
    code = code.astype(jnp.float32)

    # Constant indicator matrices (DMA'd once; constant index_map keeps them
    # resident in VMEM across grid steps).
    lane_np = np.arange(128)
    seg_ind_np = np.zeros((128, gcols), np.float32)
    seg_ind_np[lane_np, lane_np // cp] = 1.0       # (128, gcols): lane -> segment
    bcast_np = seg_ind_np.T.copy()                 # (gcols, 128): segment -> lanes
    seg_ind = jnp.asarray(seg_ind_np)
    bcast = jnp.asarray(bcast_np)

    # Tile choice: prefer a block that divides nrows exactly (no tail code).
    t_blk = min(TILE_ROWS, nrows)
    while t_blk > 1024 and nrows % t_blk:
        t_blk //= 2
    has_tail = (nrows % t_blk) != 0
    nblocks = pl.cdiv(nrows, t_blk)

    kernel = _make_masked_ce_kernel(t_blk, gcols, nrows, has_tail)

    # VMEM: 2x double-buffered logits block + 2x lane-padded metadata block +
    # two scratch accumulators, plus generous headroom for compiler scratch.
    vmem_bytes = 6 * t_blk * 128 * 4 + (16 << 20)

    out_pick, out_lse = pl.pallas_call(
        kernel,
        out_shape=(jax.ShapeDtypeStruct((1, 128), jnp.float32),
                   jax.ShapeDtypeStruct((1, gcols), jnp.float32)),
        grid_spec=pltpu.PrefetchScalarGridSpec(
            num_scalar_prefetch=0,
            grid=(nblocks,),
            in_specs=[pl.BlockSpec((t_blk, 128), lambda i: (i, 0)),
                      pl.BlockSpec((t_blk, gcols), lambda i: (i, 0)),
                      pl.BlockSpec((128, gcols), lambda i: (0, 0)),
                      pl.BlockSpec((gcols, 128), lambda i: (0, 0))],
            out_specs=(pl.BlockSpec((1, 128), lambda i: (0, 0)),
                       pl.BlockSpec((1, gcols), lambda i: (0, 0))),
            scratch_shapes=[pltpu.VMEM((t_blk, 128), jnp.float32),
                            pltpu.VMEM((t_blk, gcols), jnp.float32)]),
        compiler_params=pltpu.CompilerParams(
            dimension_semantics=("arbitrary",),
            vmem_limit_bytes=vmem_bytes),
    )(xp, code, seg_ind, bcast)

    # total = sum(mask * lse) - sum(mask * picked_logit)
    return jnp.sum(out_lse) - jnp.sum(out_pick)


def masked_cross_entropy_pallas(logits, targets, mask):
    """mean_{mask} CE(logits, targets); NaN-safe when mask is all zero."""
    cnt = jnp.sum(mask.astype(jnp.float32))        # count in plain JAX
    s = masked_ce_sum_pallas(logits, targets, mask)
    return jnp.where(cnt > 0, s / cnt, jnp.float32(0.0))


def _masked_ce_mean_jax(logits, targets, mask):
    """Tiny masked CE kept in fused XLA (a dedicated launch costs > its compute)."""
    logits = logits.astype(jnp.float32)
    lse = jax.scipy.special.logsumexp(logits, axis=-1)
    picked = jnp.take_along_axis(
        logits, targets[..., None].astype(jnp.int32), axis=-1)[..., 0]
    mask = mask.astype(jnp.float32)
    s = jnp.sum((lse - picked) * mask)
    c = jnp.sum(mask)
    return jnp.where(c > 0, s / c, jnp.float32(0.0))


# -----------------------------------------------------------------------------
# JAX glue reproducing the PyTorch masking helpers.
def _get_visibility_mask(commands, seq_dim=-1):
    S = commands.shape[seq_dim]
    return jnp.sum((commands == EOS_IDX).astype(jnp.int32), axis=seq_dim) < (S - 1)


def _get_padding_mask(commands, seq_dim=-1, extended=False):
    pm = (jnp.cumsum((commands == EOS_IDX).astype(jnp.int32), axis=seq_dim) == 0)
    pm = pm.astype(jnp.float32)
    if extended:
        # extend by one position so the first EOS is included in the loss
        shifted = jnp.concatenate([jnp.zeros_like(pm[..., :1]), pm[..., :-1]], axis=-1)
        pm = jnp.minimum(pm + shifted, 1.0)
    return pm


class CadLoss:
    def __init__(self, type='primitive'):
        assert type in ('primitive', 'feature')
        self.type = type
        self.n_cmd = N_CMD
        self.d_param = PARAM_DIM
        # (synthetic) same mask table for both flavors
        self.cmd_param_mask = jnp.asarray(PRIM_PARAM_MASK)

    def __call__(self, output, label_cmd, label_param, param_weight):
        tgt_cmd, tgt_param = label_cmd, label_param
        if self.type == 'primitive':
            cmd_logits, param_logits = output['prim_cmd'], output['prim_param']
        else:
            cmd_logits, param_logits = output['feat_cmd'], output['feat_param']

        visibility_mask = _get_visibility_mask(tgt_cmd, seq_dim=-1)          # [B]
        padding_mask_ = (_get_padding_mask(tgt_cmd, seq_dim=-1, extended=True)
                         * visibility_mask[..., None].astype(jnp.float32))   # [B, S]
        mask = self.cmd_param_mask[tgt_cmd.astype(jnp.int32)]                # [B, S, N_ARGS]

        # cmd loss: B*S rows x 6 classes -> fused plain JAX.
        loss_cmd = _masked_ce_mean_jax(cmd_logits, tgt_cmd, padding_mask_)
        # param loss: the heavy slab goes through the lane-packed Pallas kernel.
        loss_param = masked_cross_entropy_pallas(param_logits, tgt_param + 1, mask)
        return {'loss_cmd': loss_cmd, 'loss_param': loss_param * param_weight}


# -----------------------------------------------------------------------------
# Pure-JAX reference for sanity checking.
def _ref_masked_ce(logits, targets, mask):
    C = logits.shape[-1]
    logits = logits.reshape(-1, C).astype(jnp.float32)
    targets = targets.reshape(-1).astype(jnp.int32)
    mask = mask.reshape(-1).astype(jnp.float32)
    lse = jax.scipy.special.logsumexp(logits, axis=-1)
    picked = jnp.take_along_axis(logits, targets[:, None], axis=-1)[:, 0]
    return jnp.sum((lse - picked) * mask) / jnp.sum(mask)


if __name__ == "__main__":
    B, S = 2, 16
    key = jax.random.PRNGKey(0)
    k1, k2, k3, k4 = jax.random.split(key, 4)

    # label_cmd: a few real commands then EOS padding
    visible_len = 6
    real_cmds = jax.random.randint(k1, (B, S), 0, N_PRIM_COMMANDS)
    pos = jnp.arange(S)[None, :]
    label_cmd = jnp.where(pos < visible_len, real_cmds, EOS_IDX).astype(jnp.int32)

    # label_param in [-1, PARAM_DIM-2]; +1 inside the loss -> valid class ids
    label_param = jax.random.randint(k2, (B, S, N_ARGS), -1, PARAM_DIM - 1).astype(jnp.int32)

    output = {
        'prim_cmd': jax.random.normal(k3, (B, S, N_CMD), dtype=jnp.float32),
        'prim_param': jax.random.normal(k4, (B, S, N_ARGS, PARAM_DIM), dtype=jnp.float32),
    }
    param_weight = jnp.float32(2.0)

    loss_fn = CadLoss('primitive')
    losses = loss_fn(output, label_cmd, label_param, param_weight)
    losses = jax.tree_util.tree_map(jax.block_until_ready, losses)

    # sanity check vs pure-JAX reference
    vis = _get_visibility_mask(label_cmd)
    pm = _get_padding_mask(label_cmd, extended=True) * vis[..., None].astype(jnp.float32)
    arg_mask = loss_fn.cmd_param_mask[label_cmd]
    ref_cmd = _ref_masked_ce(output['prim_cmd'], label_cmd, pm)
    ref_param = _ref_masked_ce(output['prim_param'], label_param + 1, arg_mask) * param_weight
    assert jnp.allclose(losses['loss_cmd'], ref_cmd, atol=1e-4, rtol=1e-4), \
        (losses['loss_cmd'], ref_cmd)
    assert jnp.allclose(losses['loss_param'], ref_param, atol=1e-4, rtol=1e-4), \
        (losses['loss_param'], ref_param)

    print("KERNEL_OK")
</pallas_src>

<mosaic_0001>
module attributes {stable_mosaic.version = 11 : i64} {
  func.func @kernel(%arg0: i32, %arg1: memref<64x128xf32, #tpu.memory_space<vmem>>, %arg2: memref<64x8xf32, #tpu.memory_space<vmem>>, %arg3: memref<128x8xf32, #tpu.memory_space<vmem>>, %arg4: memref<8x128xf32, #tpu.memory_space<vmem>>, %arg5: memref<1x128xf32, #tpu.memory_space<vmem>>, %arg6: memref<1x8xf32, #tpu.memory_space<vmem>>, %arg7: memref<64x128xf32, #tpu.memory_space<vmem>>, %arg8: memref<64x8xf32, #tpu.memory_space<vmem>>) attributes {dimension_semantics = [#tpu.dimension_semantics<arbitrary>], iteration_bounds = array<i64: 1>, scalar_prefetch = 0 : i64, scratch_operands = 2 : i64, tpu.core_type = #tpu.core_type<tc>, window_params = [{transform_indices = @transform_0, window_bounds = array<i64: 64, 128>}, {transform_indices = @transform_1, window_bounds = array<i64: 64, 8>}, {pipeline_mode = #tpu.pipeline_mode<synchronous>, transform_indices = @transform_2, window_bounds = array<i64: 128, 8>}, {pipeline_mode = #tpu.pipeline_mode<synchronous>, transform_indices = @transform_3, window_bounds = array<i64: 8, 128>}, {pipeline_mode = #tpu.pipeline_mode<synchronous>, transform_indices = @transform_4, window_bounds = array<i64: 1, 128>}, {pipeline_mode = #tpu.pipeline_mode<synchronous>, transform_indices = @transform_5, window_bounds = array<i64: 1, 8>}]} {
    %c0_i32 = arith.constant 0 : i32
    %0 = arith.cmpi eq, %arg0, %c0_i32 : i32
    %1 = arith.extui %0 : i1 to i32
    %c0_i32_0 = arith.constant 0 : i32
    %2 = arith.cmpi ne, %1, %c0_i32_0 : i32
    scf.if %2 {
      %cst_24 = arith.constant 0.000000e+00 : f32
      %38 = vector.broadcast %cst_24 : f32 to vector<64x128xf32>
      %c0_25 = arith.constant 0 : index
      %c0_26 = arith.constant 0 : index
      %39 = vector.load %arg7[%c0_25, %c0_26] : memref<64x128xf32, #tpu.memory_space<vmem>>, vector<64x128xf32>
      tpu.vector_store %arg7[%c0_25, %c0_26], %38 {strides = array<i32>} : memref<64x128xf32, #tpu.memory_space<vmem>>, vector<64x128xf32>,
      %cst_27 = arith.constant 0.000000e+00 : f32
      %40 = vector.broadcast %cst_27 : f32 to vector<64x8xf32>
      %c0_28 = arith.constant 0 : index
      %c0_29 = arith.constant 0 : index
      %41 = vector.load %arg8[%c0_28, %c0_29] : memref<64x8xf32, #tpu.memory_space<vmem>>, vector<64x8xf32>
      tpu.vector_store %arg8[%c0_28, %c0_29], %40 {strides = array<i32>} : memref<64x8xf32, #tpu.memory_space<vmem>>, vector<64x8xf32>,
    } else {
    }
    %c0 = arith.constant 0 : index
    %c0_1 = arith.constant 0 : index
    %3 = vector.load %arg1[%c0, %c0_1] : memref<64x128xf32, #tpu.memory_space<vmem>>, vector<64x128xf32>
    %c0_2 = arith.constant 0 : index
    %c0_3 = arith.constant 0 : index
    %4 = vector.load %arg2[%c0_2, %c0_3] : memref<64x8xf32, #tpu.memory_space<vmem>>, vector<64x8xf32>
    %cst = arith.constant dense<0xFF800000> : vector<64xf32>
    %5 = vector.multi_reduction <maximumf>, %3, %cst [1] : vector<64x128xf32> to vector<64xf32>
    %6 = vector.shape_cast %5 : vector<64xf32> to vector<64x1xf32>
    %7 = vector.broadcast %6 : vector<64x1xf32> to vector<64x128xf32>
    %8 = arith.subf %3, %7 : vector<64x128xf32>
    %9 = math.exp %8 : vector<64x128xf32>
    %c0_4 = arith.constant 0 : index
    %c0_5 = arith.constant 0 : index
    %10 = vector.load %arg3[%c0_4, %c0_5] : memref<128x8xf32, #tpu.memory_space<vmem>>, vector<128x8xf32>
    %cst_6 = arith.constant dense<0.000000e+00> : vector<64x8xf32>
    %11 = tpu.matmul %9, %10, %cst_6 {dimension_numbers = #tpu.dot_dimension_numbers<[1], [0], [0], [1], [0, 0, 1, 1], [], []>, precision = #tpu.contract_precision<fp32>} : vector<64x128xf32>, vector<128x8xf32>, vector<64x8xf32> -> vector<64x8xf32>
    %cst_7 = arith.constant 1.000000e-30 : f32
    %12 = vector.broadcast %cst_7 : f32 to vector<64x8xf32>
    %13 = arith.maximumf %11, %12 : vector<64x8xf32>
    %14 = math.log %13 : vector<64x8xf32>
    %15 = vector.broadcast %6 : vector<64x1xf32> to vector<64x8xf32>
    %16 = arith.addf %15, %14 : vector<64x8xf32>
    %c0_8 = arith.constant 0 : index
    %c0_9 = arith.constant 0 : index
    %17 = vector.load %arg8[%c0_8, %c0_9] : memref<64x8xf32, #tpu.memory_space<vmem>>, vector<64x8xf32>
    %cst_10 = arith.constant 1.280000e+02 : f32
    %18 = vector.broadcast %cst_10 : f32 to vector<64x8xf32>
    %19 = arith.cmpf olt, %4, %18 : vector<64x8xf32>
    %cst_11 = arith.constant 0.000000e+00 : f32
    %20 = vector.broadcast %cst_11 : f32 to vector<64x8xf32>
    %21 = arith.select %19, %16, %20 : vector<64x8xi1>, vector<64x8xf32>
    %22 = arith.addf %17, %21 : vector<64x8xf32>
    %c0_12 = arith.constant 0 : index
    %c0_13 = arith.constant 0 : index
    %23 = vector.load %arg8[%c0_12, %c0_13] : memref<64x8xf32, #tpu.memory_space<vmem>>, vector<64x8xf32>
    tpu.vector_store %arg8[%c0_12, %c0_13], %22 {strides = array<i32>} : memref<64x8xf32, #tpu.memory_space<vmem>>, vector<64x8xf32>,
    %c0_14 = arith.constant 0 : index
    %c0_15 = arith.constant 0 : index
    %24 = vector.load %arg4[%c0_14, %c0_15] : memref<8x128xf32, #tpu.memory_space<vmem>>, vector<8x128xf32>
    %cst_16 = arith.constant dense<0.000000e+00> : vector<64x128xf32>
    %25 = tpu.matmul %4, %24, %cst_16 {dimension_numbers = #tpu.dot_dimension_numbers<[1], [0], [0], [1], [0, 0, 1, 1], [], []>, precision = #tpu.contract_precision<fp32>} : vector<64x8xf32>, vector<8x128xf32>, vector<64x128xf32> -> vector<64x128xf32>
    %26 = tpu.iota {dimensions = array<i32: 1>} : vector<1x128xi32>
    %27 = arith.sitofp %26 : vector<1x128xi32> to vector<1x128xf32>
    %c0_17 = arith.constant 0 : index
    %c0_18 = arith.constant 0 : index
    %28 = vector.load %arg7[%c0_17, %c0_18] : memref<64x128xf32, #tpu.memory_space<vmem>>, vector<64x128xf32>
    %29 = vector.broadcast %27 : vector<1x128xf32> to vector<64x128xf32>
    %30 = arith.cmpf oeq, %29, %25 : vector<64x128xf32>
    %cst_19 = arith.constant 0.000000e+00 : f32
    %31 = vector.broadcast %cst_19 : f32 to vector<64x128xf32>
    %32 = arith.select %30, %3, %31 : vector<64x128xi1>, vector<64x128xf32>
    %33 = arith.addf %28, %32 : vector<64x128xf32>
    %c0_20 = arith.constant 0 : index
    %c0_21 = arith.constant 0 : index
    %34 = vector.load %arg7[%c0_20, %c0_21] : memref<64x128xf32, #tpu.memory_space<vmem>>, vector<64x128xf32>
    tpu.vector_store %arg7[%c0_20, %c0_21], %33 {strides = array<i32>} : memref<64x128xf32, #tpu.memory_space<vmem>>, vector<64x128xf32>,
    %c0_i32_22 = arith.constant 0 : i32
    %35 = arith.cmpi eq, %arg0, %c0_i32_22 : i32
    %36 = arith.extui %35 : i1 to i32
    %c0_i32_23 = arith.constant 0 : i32
    %37 = arith.cmpi ne, %36, %c0_i32_23 : i32
    scf.if %37 {
      %c0_24 = arith.constant 0 : index
      %c0_25 = arith.constant 0 : index
      %38 = vector.load %arg7[%c0_24, %c0_25] : memref<64x128xf32, #tpu.memory_space<vmem>>, vector<64x128xf32>
      %cst_26 = arith.constant dense<0.000000e+00> : vector<128xf32>
      %39 = vector.multi_reduction <add>, %38, %cst_26 [0] : vector<64x128xf32> to vector<128xf32>
      %40 = vector.shape_cast %39 : vector<128xf32> to vector<1x128xf32>
      %c0_27 = arith.constant 0 : index
      %c0_28 = arith.constant 0 : index
      %41 = vector.load %arg5[%c0_27, %c0_28] : memref<1x128xf32, #tpu.memory_space<vmem>>, vector<1x128xf32>
      tpu.vector_store %arg5[%c0_27, %c0_28], %40 {strides = array<i32>} : memref<1x128xf32, #tpu.memory_space<vmem>>, vector<1x128xf32>,
      %c0_29 = arith.constant 0 : index
      %c0_30 = arith.constant 0 : index
      %42 = vector.load %arg8[%c0_29, %c0_30] : memref<64x8xf32, #tpu.memory_space<vmem>>, vector<64x8xf32>
      %cst_31 = arith.constant dense<0.000000e+00> : vector<8xf32>
      %43 = vector.multi_reduction <add>, %42, %cst_31 [0] : vector<64x8xf32> to vector<8xf32>
      %44 = vector.shape_cast %43 : vector<8xf32> to vector<1x8xf32>
      %c0_32 = arith.constant 0 : index
      %c0_33 = arith.constant 0 : index
      %45 = vector.load %arg6[%c0_32, %c0_33] : memref<1x8xf32, #tpu.memory_space<vmem>>, vector<1x8xf32>
      tpu.vector_store %arg6[%c0_32, %c0_33], %44 {strides = array<i32>} : memref<1x8xf32, #tpu.memory_space<vmem>>, vector<1x8xf32>,
    } else {
    }
    return
  }
  func.func @transform_0(%arg0: i32) -> (i32, i32) {
    %c0_i32 = arith.constant 0 : i32
    %c0_i32_0 = arith.constant 0 : i32
    return %arg0, %c0_i32 : i32, i32
  }
  func.func @transform_1(%arg0: i32) -> (i32, i32) {
    %c0_i32 = arith.constant 0 : i32
    %c0_i32_0 = arith.constant 0 : i32
    return %arg0, %c0_i32 : i32, i32
  }
  func.func @transform_2(%arg0: i32) -> (i32, i32) {
    %c0_i32 = arith.constant 0 : i32
    %c0_i32_0 = arith.constant 0 : i32
    %c0_i32_1 = arith.constant 0 : i32
    return %c0_i32, %c0_i32_0 : i32, i32
  }
  func.func @transform_3(%arg0: i32) -> (i32, i32) {
    %c0_i32 = arith.constant 0 : i32
    %c0_i32_0 = arith.constant 0 : i32
    %c0_i32_1 = arith.constant 0 : i32
    return %c0_i32, %c0_i32_0 : i32, i32
  }
  func.func @transform_4(%arg0: i32) -> (i32, i32) {
    %c0_i32 = arith.constant 0 : i32
    %c0_i32_0 = arith.constant 0 : i32
    %c0_i32_1 = arith.constant 0 : i32
    return %c0_i32, %c0_i32_0 : i32, i32
  }
  func.func @transform_5(%arg0: i32) -> (i32, i32) {
    %c0_i32 = arith.constant 0 : i32
    %c0_i32_0 = arith.constant 0 : i32
    %c0_i32_1 = arith.constant 0 : i32
    return %c0_i32, %c0_i32_0 : i32, i32
  }
}

</mosaic_0001>

<llo_original>
// kernel: tpu_custom_call.1
$region0: #{tpu_custom_call.1}
  #allocation0 [shape = 'u32[]', space=smem, size = 0x4, offset = 0x4, fixed_abs, tag = 'smem constant byte address 0x4 - core index']
  #allocation1 [shape = 'u32[144,128]{1,0:T(1,128)}', space=vmem, size = 0x12000, scoped, tag = 'internal scratch']
  #allocation2 [shape = 'f32[64,128]{1,0:T(8,128)}', space=vmem, size = 0x8000, scoped, tag = 'scratch operand']
  #allocation3 [shape = 'f32[64,8]{1,0:T(8,128)}', space=vmem, size = 0x8000, scoped, tag = 'scratch operand']
  %s0 = inlined_call_operand.vmem [shape: f32[64,128], index: 0, kind: input, shape index: {}]
  %s1 = inlined_call_operand.vmem [shape: f32[64,8], index: 1, kind: input, shape index: {}]
  %s2 = inlined_call_operand.vmem [shape: f32[128,8], index: 2, kind: input, shape index: {}]
  %s3 = inlined_call_operand.vmem [shape: f32[8,128], index: 3, kind: input, shape index: {}]
  %s4 = inlined_call_operand.hbm [shape: f32[1,128], index: 4, kind: output, shape index: {0}]
  %s5 = inlined_call_operand.hbm [shape: f32[1,8], index: 5, kind: output, shape index: {1}]
  %6 = xla_tuple %s4, %s5
  %s7 = sld [smem:[#allocation0]]
  $region42: #{tpu_custom_call.1} parent=0
    _
  %s9 = ssub.s32 1, %s7
  %s10 = scalar_select 0, %s9, %s7
  $region1: #{tpu_custom_call.1} parent=0
    #allocation4 [shape = 'u8[512]{0}', space=vmem, size = 0x400, scoped, tag = 'output window, operand 0, single buffered']
    #allocation5 [shape = 's32[1]{0}', space=sflag, size = 0x4, scoped, tag = 'scoped memory for tpu_custom_call.1']
    #allocation6 [shape = 'u8[512]{0}', space=vmem, size = 0x400, scoped, tag = 'output window, operand 1, single buffered']
    #allocation7 [shape = 's32[1]{0}', space=sflag, size = 0x4, scoped, tag = 'scoped memory for tpu_custom_call.1']
    %11 = vsyncpa [#allocation5], 0
    %12 = vsyncpa [#allocation7], 0
    // Predicated region
    $region2: #{tpu_custom_call.1} parent=1 // pred_check
      _
    $region3: #{tpu_custom_call.1} parent=1 // pred_check_branch
      %14 = sbr.rel (0) target = $region5
    $region4: #{tpu_custom_call.1} parent=1 // pred_region
      _
    $region5: #{tpu_custom_call.1} parent=1 // pred_fallthru
      _
    // Predicated region
    $region6: #{tpu_custom_call.1} parent=1 // pred_check
      _
    $region7: #{tpu_custom_call.1} parent=1 // pred_check_branch
      %16 = sbr.rel (0) target = $region9
    $region8: #{tpu_custom_call.1} parent=1 // pred_region
      _
    $region9: #{tpu_custom_call.1} parent=1 // pred_fallthru
      _
    // Predicated region
    $region10: #{tpu_custom_call.1} parent=1 // pred_check
      _
    $region11: #{tpu_custom_call.1} parent=1 // pred_check_branch
      %18 = sbr.rel (0) target = $region13
    $region12: #{tpu_custom_call.1} parent=1 // pred_region
      _
    $region13: #{tpu_custom_call.1} parent=1 // pred_fallthru
      _
    // Predicated region
    $region14: #{tpu_custom_call.1} parent=1 // pred_check
      _
    $region15: #{tpu_custom_call.1} parent=1 // pred_check_branch
      %20 = sbr.rel (0) target = $region17
    $region16: #{tpu_custom_call.1} parent=1 // pred_region
      _
    $region17: #{tpu_custom_call.1} parent=1 // pred_fallthru
      _
    %p21 = scmp.eq.s32.totalorder 0, 0
    // Predicated region
    $region18: #{tpu_custom_call.1} parent=1 // pred_check
      %p22 = pneg %p21
    $region19: #{tpu_custom_call.1} parent=1 // pred_check_branch
      %24 = sbr.rel (%p22) target = $region21
    $region20: #{tpu_custom_call.1} parent=1 // pred_region
      %25 = vst [vmem:[#allocation2] sm:$0xff] 0.0
      %26 = vst [vmem:[#allocation2 + $0x8] sm:$0xff] 0.0
      %27 = vst [vmem:[#allocation2 + $0x10] sm:$0xff] 0.0
      %28 = vst [vmem:[#allocation2 + $0x18] sm:$0xff] 0.0
      %29 = vst [vmem:[#allocation2 + $0x20] sm:$0xff] 0.0
      %30 = vst [vmem:[#allocation2 + $0x28] sm:$0xff] 0.0
      %31 = vst [vmem:[#allocation2 + $0x30] sm:$0xff] 0.0
      %32 = vst [vmem:[#allocation2 + $0x38] sm:$0xff] 0.0
      %vm33 = vcmask 64512
      %34 = vst.msk [vmem:[#allocation3] sm:$0xff] %vm33, 0.0
      %35 = vst.msk [vmem:[#allocation3 + $0x8] sm:$0xff] %vm33, 0.0
      %36 = vst.msk [vmem:[#allocation3 + $0x10] sm:$0xff] %vm33, 0.0
      %37 = vst.msk [vmem:[#allocation3 + $0x18] sm:$0xff] %vm33, 0.0
      %38 = vst.msk [vmem:[#allocation3 + $0x20] sm:$0xff] %vm33, 0.0
      %39 = vst.msk [vmem:[#allocation3 + $0x28] sm:$0xff] %vm33, 0.0
      %40 = vst.msk [vmem:[#allocation3 + $0x30] sm:$0xff] %vm33, 0.0
      %41 = vst.msk [vmem:[#allocation3 + $0x38] sm:$0xff] %vm33, 0.0
    $region21: #{tpu_custom_call.1} parent=1 // pred_fallthru
      _
    %v42 = vld [vmem:[%s0] sm:$0xff]
    %v43 = vld [vmem:[%s0 + $0x8] sm:$0xff]
    %v44 = vld [vmem:[%s0 + $0x10] sm:$0xff]
    %v45 = vld [vmem:[%s0 + $0x18] sm:$0xff]
    %v46 = vld [vmem:[%s0 + $0x20] sm:$0xff]
    %v47 = vld [vmem:[%s0 + $0x28] sm:$0xff]
    %v48 = vld [vmem:[%s0 + $0x30] sm:$0xff]
    %v49 = vld [vmem:[%s0 + $0x38] sm:$0xff]
    %v50 = vld [vmem:[%s1] sm:$0xff]
    %v51 = vld [vmem:[%s1 + $0x8] sm:$0xff]
    %v52 = vld [vmem:[%s1 + $0x10] sm:$0xff]
    %v53 = vld [vmem:[%s1 + $0x18] sm:$0xff]
    %v54 = vld [vmem:[%s1 + $0x20] sm:$0xff]
    %v55 = vld [vmem:[%s1 + $0x28] sm:$0xff]
    %v56 = vld [vmem:[%s1 + $0x30] sm:$0xff]
    %v57 = vld [vmem:[%s1 + $0x38] sm:$0xff]
    %58 = vmax.xlane.f32.xlu0 %v42
    %v59 = vpop.xlane.xlu0 %58
    %60 = vmax.xlane.f32.xlu0 %v43
    %v61 = vpop.xlane.xlu0 %60
    %62 = vmax.xlane.f32.xlu0 %v44
    %v63 = vpop.xlane.xlu0 %62
    %64 = vmax.xlane.f32.xlu0 %v45
    %v65 = vpop.xlane.xlu0 %64
    %66 = vmax.xlane.f32.xlu0 %v46
    %v67 = vpop.xlane.xlu0 %66
    %68 = vmax.xlane.f32.xlu0 %v47
    %v69 = vpop.xlane.xlu0 %68
    %70 = vmax.xlane.f32.xlu0 %v48
    %v71 = vpop.xlane.xlu0 %70
    %72 = vmax.xlane.f32.xlu0 %v49
    %v73 = vpop.xlane.xlu0 %72
    %v74 = vsub.f32 %v42, %v59
    %v75 = vsub.f32 %v43, %v61
    %v76 = vsub.f32 %v44, %v63
    %v77 = vsub.f32 %v45, %v65
    %v78 = vsub.f32 %v46, %v67
    %v79 = vsub.f32 %v47, %v69
    %v80 = vsub.f32 %v48, %v71
    %v81 = vsub.f32 %v49, %v73
    %v82 = vmul.f32 %v74, 1.442695
    %v83 = vpow.pop %v82
    %v84 = vmul.f32 %v75, 1.442695
    %v85 = vpow.pop %v84
    %v86 = vmul.f32 %v76, 1.442695
    %v87 = vpow.pop %v86
    %v88 = vmul.f32 %v77, 1.442695
    %v89 = vpow.pop %v88
    %v90 = vmul.f32 %v78, 1.442695
    %v91 = vpow.pop %v90
    %v92 = vmul.f32 %v79, 1.442695
    %v93 = vpow.pop %v92
    %v94 = vmul.f32 %v80, 1.442695
    %v95 = vpow.pop %v94
    %v96 = vmul.f32 %v81, 1.442695
    %v97 = vpow.pop %v96
    %v98 = vld [vmem:[%s2] sm:$0xff]
    %v99 = vld [vmem:[%s2 + $0x8] sm:$0xff]
    %v100 = vld [vmem:[%s2 + $0x10] sm:$0xff]
    %v101 = vld [vmem:[%s2 + $0x18] sm:$0xff]
    %v102 = vld [vmem:[%s2 + $0x20] sm:$0xff]
    %v103 = vld [vmem:[%s2 + $0x28] sm:$0xff]
    %v104 = vld [vmem:[%s2 + $0x30] sm:$0xff]
    %v105 = vld [vmem:[%s2 + $0x38] sm:$0xff]
    %v106 = vld [vmem:[%s2 + $0x40] sm:$0xff]
    %v107 = vld [vmem:[%s2 + $0x48] sm:$0xff]
    %v108 = vld [vmem:[%s2 + $0x50] sm:$0xff]
    %v109 = vld [vmem:[%s2 + $0x58] sm:$0xff]
    %v110 = vld [vmem:[%s2 + $0x60] sm:$0xff]
    %v111 = vld [vmem:[%s2 + $0x68] sm:$0xff]
    %v112 = vld [vmem:[%s2 + $0x70] sm:$0xff]
    %v113 = vld [vmem:[%s2 + $0x78] sm:$0xff]
    %114 = vmatprep.subr.mxu0 0.0
    %v115 = vand.u32 %v113, 4294901760
    %116 = vmatpush1.msra.mxu0 %v115
    %117 = vmatprep.subr.mxu0 0.0
    %v118 = vand.u32 %v112, 4294901760
    %119 = vmatpush1.msra.mxu0 %v118
    %120 = vmatprep.subr.mxu0 0.0
    %v121 = vand.u32 %v111, 4294901760
    %122 = vmatpush1.msra.mxu0 %v121
    %123 = vmatprep.subr.mxu0 0.0
    %v124 = vand.u32 %v110, 4294901760
    %125 = vmatpush1.msra.mxu0 %v124
    %126 = vmatprep.subr.mxu0 0.0
    %v127 = vand.u32 %v109, 4294901760
    %128 = vmatpush1.msra.mxu0 %v127
    %129 = vmatprep.subr.mxu0 0.0
    %v130 = vand.u32 %v108, 4294901760
    %131 = vmatpush1.msra.mxu0 %v130
    %132 = vmatprep.subr.mxu0 0.0
    %v133 = vand.u32 %v107, 4294901760
    %134 = vmatpush1.msra.mxu0 %v133
    %135 = vmatprep.subr.mxu0 0.0
    %v136 = vand.u32 %v106, 4294901760
    %137 = vmatpush1.msra.mxu0 %v136
    %138 = vmatprep.subr.mxu0 0.0
    %v139 = vand.u32 %v105, 4294901760
    %140 = vmatpush1.msra.mxu0 %v139
    %141 = vmatprep.subr.mxu0 0.0
    %v142 = vand.u32 %v104, 4294901760
    %143 = vmatpush1.msra.mxu0 %v142
    %144 = vmatprep.subr.mxu0 0.0
    %v145 = vand.u32 %v103, 4294901760
    %146 = vmatpush1.msra.mxu0 %v145
    %147 = vmatprep.subr.mxu0 0.0
    %v148 = vand.u32 %v102, 4294901760
    %149 = vmatpush1.msra.mxu0 %v148
    %150 = vmatprep.subr.mxu0 0.0
    %v151 = vand.u32 %v101, 4294901760
    %152 = vmatpush1.msra.mxu0 %v151
    %153 = vmatprep.subr.mxu0 0.0
    %v154 = vand.u32 %v100, 4294901760
    %155 = vmatpush1.msra.mxu0 %v154
    %156 = vmatprep.subr.mxu0 0.0
    %v157 = vand.u32 %v99, 4294901760
    %158 = vmatpush1.msra.mxu0 %v157
    %159 = vmatprep.subr.mxu0 0.0
    %v160 = vand.u32 %v98, 4294901760
    %161 = vmatpush1.msra.mxu0 %v160
    %162 = vmatprep.subr.mxu0 0.0
    %163 = vmatpush2.msra.mxu0 0.0
    %164 = vmatprep.subr.mxu0 0.0
    %165 = vmatpush2.msra.mxu0 0.0
    %166 = vmatprep.subr.mxu0 0.0
    %167 = vmatpush2.msra.mxu0 0.0
    %168 = vmatprep.subr.mxu0 0.0
    %169 = vmatpush2.msra.mxu0 0.0
    %170 = vmatprep.subr.mxu0 0.0
    %171 = vmatpush2.msra.mxu0 0.0
    %172 = vmatprep.subr.mxu0 0.0
    %173 = vmatpush2.msra.mxu0 0.0
    %174 = vmatprep.subr.mxu0 0.0
    %175 = vmatpush2.msra.mxu0 0.0
    %176 = vmatprep.subr.mxu0 0.0
    %177 = vmatpush2.msra.mxu0 0.0
    %178 = vmatprep.subr.mxu0 0.0
    %179 = vmatpush2.msra.mxu0 0.0
    %180 = vmatprep.subr.mxu0 0.0
    %181 = vmatpush2.msra.mxu0 0.0
    %182 = vmatprep.subr.mxu0 0.0
    %183 = vmatpush2.msra.mxu0 0.0
    %184 = vmatprep.subr.mxu0 0.0
    %185 = vmatpush2.msra.mxu0 0.0
    %186 = vmatprep.subr.mxu0 0.0
    %187 = vmatpush2.msra.mxu0 0.0
    %188 = vmatprep.subr.mxu0 0.0
    %189 = vmatpush2.msra.mxu0 0.0
    %190 = vmatprep.subr.mxu0 0.0
    %191 = vmatpush2.msra.mxu0 0.0
    %192 = vmatprep.subr.mxu0 0.0
    %193 = vmatpush2.msra.mxu0 0.0
    %194 = vmatprep.mubr.f32.mxu0 0.0
    %v195 = vand.u32 %v83, 4294901760
    %v196 = vsub.f32 %v83, %v195
    %v197 = vand.u32 %v196, 4294901760
    %v198 = vsub.f32 %v196, %v197
    %v199 = vand.u32 %v198, 4294901760
    %200 = vmatmul.mubr.f32.gmra.mxu0 %v199
    %v201 = vpop.f32.mrf.mxu0
    %v202 = vadd.f32 0.0, %v201
    %v203 = vpop.f32.mrf.mxu0
    %204 = vmatprep.mubr.f32.mxu0 0.0
    %v205 = vand.u32 %v85, 4294901760
    %v206 = vsub.f32 %v85, %v205
    %v207 = vand.u32 %v206, 4294901760
    %v208 = vsub.f32 %v206, %v207
    %v209 = vand.u32 %v208, 4294901760
    %210 = vmatmul.mubr.f32.gmra.mxu0 %v209
    %v211 = vpop.f32.mrf.mxu0
    %v212 = vadd.f32 0.0, %v211
    %v213 = vpop.f32.mrf.mxu0
    %214 = vmatprep.mubr.f32.mxu0 0.0
    %v215 = vand.u32 %v87, 4294901760
    %v216 = vsub.f32 %v87, %v215
    %v217 = vand.u32 %v216, 4294901760
    %v218 = vsub.f32 %v216, %v217
    %v219 = vand.u32 %v218, 4294901760
    %220 = vmatmul.mubr.f32.gmra.mxu0 %v219
    %v221 = vpop.f32.mrf.mxu0
    %v222 = vadd.f32 0.0, %v221
    %v223 = vpop.f32.mrf.mxu0
    %224 = vmatprep.mubr.f32.mxu0 0.0
    %v225 = vand.u32 %v89, 4294901760
    %v226 = vsub.f32 %v89, %v225
    %v227 = vand.u32 %v226, 4294901760
    %v228 = vsub.f32 %v226, %v227
    %v229 = vand.u32 %v228, 4294901760
    %230 = vmatmul.mubr.f32.gmra.mxu0 %v229
    %v231 = vpop.f32.mrf.mxu0
    %v232 = vadd.f32 0.0, %v231
    %v233 = vpop.f32.mrf.mxu0
    %234 = vmatprep.mubr.f32.mxu0 0.0
    %v235 = vand.u32 %v91, 4294901760
    %v236 = vsub.f32 %v91, %v235
    %v237 = vand.u32 %v236, 4294901760
    %v238 = vsub.f32 %v236, %v237
    %v239 = vand.u32 %v238, 4294901760
    %240 = vmatmul.mubr.f32.gmra.mxu0 %v239
    %v241 = vpop.f32.mrf.mxu0
    %v242 = vadd.f32 0.0, %v241
    %v243 = vpop.f32.mrf.mxu0
    %244 = vmatprep.mubr.f32.mxu0 0.0
    %v245 = vand.u32 %v93, 4294901760
    %v246 = vsub.f32 %v93, %v245
    %v247 = vand.u32 %v246, 4294901760
    %v248 = vsub.f32 %v246, %v247
    %v249 = vand.u32 %v248, 4294901760
    %250 = vmatmul.mubr.f32.gmra.mxu0 %v249
    %v251 = vpop.f32.mrf.mxu0
    %v252 = vadd.f32 0.0, %v251
    %v253 = vpop.f32.mrf.mxu0
    %254 = vmatprep.mubr.f32.mxu0 0.0
    %v255 = vand.u32 %v95, 4294901760
    %v256 = vsub.f32 %v95, %v255
    %v257 = vand.u32 %v256, 4294901760
    %v258 = vsub.f32 %v256, %v257
    %v259 = vand.u32 %v258, 4294901760
    %260 = vmatmul.mubr.f32.gmra.mxu0 %v259
    %v261 = vpop.f32.mrf.mxu0
    %v262 = vadd.f32 0.0, %v261
    %v263 = vpop.f32.mrf.mxu0
    %264 = vmatprep.mubr.f32.mxu0 0.0
    %v265 = vand.u32 %v97, 4294901760
    %v266 = vsub.f32 %v97, %v265
    %v267 = vand.u32 %v266, 4294901760
    %v268 = vsub.f32 %v266, %v267
    %v269 = vand.u32 %v268, 4294901760
    %270 = vmatmul.mubr.f32.gmra.mxu0 %v269
    %v271 = vpop.f32.mrf.mxu0
    %v272 = vadd.f32 0.0, %v271
    %v273 = vpop.f32.mrf.mxu0
    %274 = vdwg.mxu0
    %275 = vmatprep.subr.mxu0 0.0
    %v276 = vand.u32 %v113, 4294901760
    %v277 = vsub.f32 %v113, %v276
    %v278 = vand.u32 %v277, 4294901760
    %v279 = vsub.f32 %v277, %v278
    %v280 = vand.u32 %v279, 4294901760
    %281 = vmatpush1.msra.mxu0 %v280
    %282 = vmatprep.subr.mxu0 0.0
    %v283 = vand.u32 %v112, 4294901760
    %v284 = vsub.f32 %v112, %v283
    %v285 = vand.u32 %v284, 4294901760
    %v286 = vsub.f32 %v284, %v285
    %v287 = vand.u32 %v286, 4294901760
    %288 = vmatpush1.msra.mxu0 %v287
    %289 = vmatprep.subr.mxu0 0.0
    %v290 = vand.u32 %v111, 4294901760
    %v291 = vsub.f32 %v111, %v290
    %v292 = vand.u32 %v291, 4294901760
    %v293 = vsub.f32 %v291, %v292
    %v294 = vand.u32 %v293, 4294901760
    %295 = vmatpush1.msra.mxu0 %v294
    %296 = vmatprep.subr.mxu0 0.0
    %v297 = vand.u32 %v110, 4294901760
    %v298 = vsub.f32 %v110, %v297
    %v299 = vand.u32 %v298, 4294901760
    %v300 = vsub.f32 %v298, %v299
    %v301 = vand.u32 %v300, 4294901760
    %302 = vmatpush1.msra.mxu0 %v301
    %303 = vmatprep.subr.mxu0 0.0
    %v304 = vand.u32 %v109, 4294901760
    %v305 = vsub.f32 %v109, %v304
    %v306 = vand.u32 %v305, 4294901760
    %v307 = vsub.f32 %v305, %v306
    %v308 = vand.u32 %v307, 4294901760
    %309 = vmatpush1.msra.mxu0 %v308
    %310 = vmatprep.subr.mxu0 0.0
    %v311 = vand.u32 %v108, 4294901760
    %v312 = vsub.f32 %v108, %v311
    %v313 = vand.u32 %v312, 4294901760
    %v314 = vsub.f32 %v312, %v313
    %v315 = vand.u32 %v314, 4294901760
    %316 = vmatpush1.msra.mxu0 %v315
    %317 = vmatprep.subr.mxu0 0.0
    %v318 = vand.u32 %v107, 4294901760
    %v319 = vsub.f32 %v107, %v318
    %v320 = vand.u32 %v319, 4294901760
    %v321 = vsub.f32 %v319, %v320
    %v322 = vand.u32 %v321, 4294901760
    %323 = vmatpush1.msra.mxu0 %v322
    %324 = vmatprep.subr.mxu0 0.0
    %v325 = vand.u32 %v106, 4294901760
    %v326 = vsub.f32 %v106, %v325
    %v327 = vand.u32 %v326, 4294901760
    %v328 = vsub.f32 %v326, %v327
    %v329 = vand.u32 %v328, 4294901760
    %330 = vmatpush1.msra.mxu0 %v329
    %331 = vmatprep.subr.mxu0 0.0
    %v332 = vand.u32 %v105, 4294901760
    %v333 = vsub.f32 %v105, %v332
    %v334 = vand.u32 %v333, 4294901760
    %v335 = vsub.f32 %v333, %v334
    %v336 = vand.u32 %v335, 4294901760
    %337 = vmatpush1.msra.mxu0 %v336
    %338 = vmatprep.subr.mxu0 0.0
    %v339 = vand.u32 %v104, 4294901760
    %v340 = vsub.f32 %v104, %v339
    %v341 = vand.u32 %v340, 4294901760
    %v342 = vsub.f32 %v340, %v341
    %v343 = vand.u32 %v342, 4294901760
    %344 = vmatpush1.msra.mxu0 %v343
    %345 = vmatprep.subr.mxu0 0.0
    %v346 = vand.u32 %v103, 4294901760
    %v347 = vsub.f32 %v103, %v346
    %v348 = vand.u32 %v347, 4294901760
    %v349 = vsub.f32 %v347, %v348
    %v350 = vand.u32 %v349, 4294901760
    %351 = vmatpush1.msra.mxu0 %v350
    %352 = vmatprep.subr.mxu0 0.0
    %v353 = vand.u32 %v102, 4294901760
    %v354 = vsub.f32 %v102, %v353
    %v355 = vand.u32 %v354, 4294901760
    %v356 = vsub.f32 %v354, %v355
    %v357 = vand.u32 %v356, 4294901760
    %358 = vmatpush1.msra.mxu0 %v357
    %359 = vmatprep.subr.mxu0 0.0
    %v360 = vand.u32 %v101, 4294901760
    %v361 = vsub.f32 %v101, %v360
    %v362 = vand.u32 %v361, 4294901760
    %v363 = vsub.f32 %v361, %v362
    %v364 = vand.u32 %v363, 4294901760
    %365 = vmatpush1.msra.mxu0 %v364
    %366 = vmatprep.subr.mxu0 0.0
    %v367 = vand.u32 %v100, 4294901760
    %v368 = vsub.f32 %v100, %v367
    %v369 = vand.u32 %v368, 4294901760
    %v370 = vsub.f32 %v368, %v369
    %v371 = vand.u32 %v370, 4294901760
    %372 = vmatpush1.msra.mxu0 %v371
    %373 = vmatprep.subr.mxu0 0.0
    %v374 = vand.u32 %v99, 4294901760
    %v375 = vsub.f32 %v99, %v374
    %v376 = vand.u32 %v375, 4294901760
    %v377 = vsub.f32 %v375, %v376
    %v378 = vand.u32 %v377, 4294901760
    %379 = vmatpush1.msra.mxu0 %v378
    %380 = vmatprep.subr.mxu0 0.0
    %v381 = vand.u32 %v98, 4294901760
    %v382 = vsub.f32 %v98, %v381
    %v383 = vand.u32 %v382, 4294901760
    %v384 = vsub.f32 %v382, %v383
    %v385 = vand.u32 %v384, 4294901760
    %386 = vmatpush1.msra.mxu0 %v385
    %387 = vmatprep.subr.mxu0 0.0
    %388 = vmatpush2.msra.mxu0 0.0
    %389 = vmatprep.subr.mxu0 0.0
    %390 = vmatpush2.msra.mxu0 0.0
    %391 = vmatprep.subr.mxu0 0.0
    %392 = vmatpush2.msra.mxu0 0.0
    %393 = vmatprep.subr.mxu0 0.0
    %394 = vmatpush2.msra.mxu0 0.0
    %395 = vmatprep.subr.mxu0 0.0
    %396 = vmatpush2.msra.mxu0 0.0
    %397 = vmatprep.subr.mxu0 0.0
    %398 = vmatpush2.msra.mxu0 0.0
    %399 = vmatprep.subr.mxu0 0.0
    %400 = vmatpush2.msra.mxu0 0.0
    %401 = vmatprep.subr.mxu0 0.0
    %402 = vmatpush2.msra.mxu0 0.0
    %403 = vmatprep.subr.mxu0 0.0
    %404 = vmatpush2.msra.mxu0 0.0
    %405 = vmatprep.subr.mxu0 0.0
    %406 = vmatpush2.msra.mxu0 0.0
    %407 = vmatprep.subr.mxu0 0.0
    %408 = vmatpush2.msra.mxu0 0.0
    %409 = vmatprep.subr.mxu0 0.0
    %410 = vmatpush2.msra.mxu0 0.0
    %411 = vmatprep.subr.mxu0 0.0
    %412 = vmatpush2.msra.mxu0 0.0
    %413 = vmatprep.subr.mxu0 0.0
    %414 = vmatpush2.msra.mxu0 0.0
    %415 = vmatprep.subr.mxu0 0.0
    %416 = vmatpush2.msra.mxu0 0.0
    %417 = vmatprep.subr.mxu0 0.0
    %418 = vmatpush2.msra.mxu0 0.0
    %419 = vmatprep.mubr.f32.mxu0 0.0
    %v420 = vand.u32 %v83, 4294901760
    %421 = vmatmul.mubr.f32.gmra.mxu0 %v420
    %v422 = vpop.f32.mrf.mxu0
    %v423 = vadd.f32 %v202, %v422
    %v424 = vpop.f32.mrf.mxu0
    %425 = vmatprep.mubr.f32.mxu0 0.0
    %v426 = vand.u32 %v85, 4294901760
    %427 = vmatmul.mubr.f32.gmra.mxu0 %v426
    %v428 = vpop.f32.mrf.mxu0
    %v429 = vadd.f32 %v212, %v428
    %v430 = vpop.f32.mrf.mxu0
    %431 = vmatprep.mubr.f32.mxu0 0.0
    %v432 = vand.u32 %v87, 4294901760
    %433 = vmatmul.mubr.f32.gmra.mxu0 %v432
    %v434 = vpop.f32.mrf.mxu0
    %v435 = vadd.f32 %v222, %v434
    %v436 = vpop.f32.mrf.mxu0
    %437 = vmatprep.mubr.f32.mxu0 0.0
    %v438 = vand.u32 %v89, 4294901760
    %439 = vmatmul.mubr.f32.gmra.mxu0 %v438
    %v440 = vpop.f32.mrf.mxu0
    %v441 = vadd.f32 %v232, %v440
    %v442 = vpop.f32.mrf.mxu0
    %443 = vmatprep.mubr.f32.mxu0 0.0
    %v444 = vand.u32 %v91, 4294901760
    %445 = vmatmul.mubr.f32.gmra.mxu0 %v444
    %v446 = vpop.f32.mrf.mxu0
    %v447 = vadd.f32 %v242, %v446
    %v448 = vpop.f32.mrf.mxu0
    %449 = vmatprep.mubr.f32.mxu0 0.0
    %v450 = vand.u32 %v93, 4294901760
    %451 = vmatmul.mubr.f32.gmra.mxu0 %v450
    %v452 = vpop.f32.mrf.mxu0
    %v453 = vadd.f32 %v252, %v452
    %v454 = vpop.f32.mrf.mxu0
    %455 = vmatprep.mubr.f32.mxu0 0.0
    %v456 = vand.u32 %v95, 4294901760
    %457 = vmatmul.mubr.f32.gmra.mxu0 %v456
    %v458 = vpop.f32.mrf.mxu0
    %v459 = vadd.f32 %v262, %v458
    %v460 = vpop.f32.mrf.mxu0
    %461 = vmatprep.mubr.f32.mxu0 0.0
    %v462 = vand.u32 %v97, 4294901760
    %463 = vmatmul.mubr.f32.gmra.mxu0 %v462
    %v464 = vpop.f32.mrf.mxu0
    %v465 = vadd.f32 %v272, %v464
    %v466 = vpop.f32.mrf.mxu0
    %467 = vdwg.mxu0
    %468 = vmatprep.subr.mxu0 0.0
    %v469 = vand.u32 %v113, 4294901760
    %v470 = vsub.f32 %v113, %v469
    %471 = vmatpush1.msra.mxu0 %v470
    %472 = vmatprep.subr.mxu0 0.0
    %v473 = vand.u32 %v112, 4294901760
    %v474 = vsub.f32 %v112, %v473
    %475 = vmatpush1.msra.mxu0 %v474
    %476 = vmatprep.subr.mxu0 0.0
    %v477 = vand.u32 %v111, 4294901760
    %v478 = vsub.f32 %v111, %v477
    %479 = vmatpush1.msra.mxu0 %v478
    %480 = vmatprep.subr.mxu0 0.0
    %v481 = vand.u32 %v110, 4294901760
    %v482 = vsub.f32 %v110, %v481
    %483 = vmatpush1.msra.mxu0 %v482
    %484 = vmatprep.subr.mxu0 0.0
    %v485 = vand.u32 %v109, 4294901760
    %v486 = vsub.f32 %v109, %v485
    %487 = vmatpush1.msra.mxu0 %v486
    %488 = vmatprep.subr.mxu0 0.0
    %v489 = vand.u32 %v108, 4294901760
    %v490 = vsub.f32 %v108, %v489
    %491 = vmatpush1.msra.mxu0 %v490
    %492 = vmatprep.subr.mxu0 0.0
    %v493 = vand.u32 %v107, 4294901760
    %v494 = vsub.f32 %v107, %v493
    %495 = vmatpush1.msra.mxu0 %v494
    %496 = vmatprep.subr.mxu0 0.0
    %v497 = vand.u32 %v106, 4294901760
    %v498 = vsub.f32 %v106, %v497
    %499 = vmatpush1.msra.mxu0 %v498
    %500 = vmatprep.subr.mxu0 0.0
    %v501 = vand.u32 %v105, 4294901760
    %v502 = vsub.f32 %v105, %v501
    %503 = vmatpush1.msra.mxu0 %v502
    %504 = vmatprep.subr.mxu0 0.0
    %v505 = vand.u32 %v104, 4294901760
    %v506 = vsub.f32 %v104, %v505
    %507 = vmatpush1.msra.mxu0 %v506
    %508 = vmatprep.subr.mxu0 0.0
    %v509 = vand.u32 %v103, 4294901760
    %v510 = vsub.f32 %v103, %v509
    %511 = vmatpush1.msra.mxu0 %v510
    %512 = vmatprep.subr.mxu0 0.0
    %v513 = vand.u32 %v102, 4294901760
    %v514 = vsub.f32 %v102, %v513
    %515 = vmatpush1.msra.mxu0 %v514
    %516 = vmatprep.subr.mxu0 0.0
    %v517 = vand.u32 %v101, 4294901760
    %v518 = vsub.f32 %v101, %v517
    %519 = vmatpush1.msra.mxu0 %v518
    %520 = vmatprep.subr.mxu0 0.0
    %v521 = vand.u32 %v100, 4294901760
    %v522 = vsub.f32 %v100, %v521
    %523 = vmatpush1.msra.mxu0 %v522
    %524 = vmatprep.subr.mxu0 0.0
    %v525 = vand.u32 %v99, 4294901760
    %v526 = vsub.f32 %v99, %v525
    %527 = vmatpush1.msra.mxu0 %v526
    %528 = vmatprep.subr.mxu0 0.0
    %v529 = vand.u32 %v98, 4294901760
    %v530 = vsub.f32 %v98, %v529
    %531 = vmatpush1.msra.mxu0 %v530
    %532 = vmatprep.subr.mxu0 0.0
    %533 = vmatpush2.msra.mxu0 0.0
    %534 = vmatprep.subr.mxu0 0.0
    %535 = vmatpush2.msra.mxu0 0.0
    %536 = vmatprep.subr.mxu0 0.0
    %537 = vmatpush2.msra.mxu0 0.0
    %538 = vmatprep.subr.mxu0 0.0
    %539 = vmatpush2.msra.mxu0 0.0
    %540 = vmatprep.subr.mxu0 0.0
    %541 = vmatpush2.msra.mxu0 0.0
    %542 = vmatprep.subr.mxu0 0.0
    %543 = vmatpush2.msra.mxu0 0.0
    %544 = vmatprep.subr.mxu0 0.0
    %545 = vmatpush2.msra.mxu0 0.0
    %546 = vmatprep.subr.mxu0 0.0
    %547 = vmatpush2.msra.mxu0 0.0
    %548 = vmatprep.subr.mxu0 0.0
    %549 = vmatpush2.msra.mxu0 0.0
    %550 = vmatprep.subr.mxu0 0.0
    %551 = vmatpush2.msra.mxu0 0.0
    %552 = vmatprep.subr.mxu0 0.0
    %553 = vmatpush2.msra.mxu0 0.0
    %554 = vmatprep.subr.mxu0 0.0
    %555 = vmatpush2.msra.mxu0 0.0
    %556 = vmatprep.subr.mxu0 0.0
    %557 = vmatpush2.msra.mxu0 0.0
    %558 = vmatprep.subr.mxu0 0.0
    %559 = vmatpush2.msra.mxu0 0.0
    %560 = vmatprep.subr.mxu0 0.0
    %561 = vmatpush2.msra.mxu0 0.0
    %562 = vmatprep.subr.mxu0 0.0
    %563 = vmatpush2.msra.mxu0 0.0
    %564 = vmatprep.mubr.f32.mxu0 0.0
    %v565 = vand.u32 %v83, 4294901760
    %v566 = vsub.f32 %v83, %v565
    %567 = vmatmul.mubr.f32.gmra.mxu0 %v566
    %v568 = vpop.f32.mrf.mxu0
    %v569 = vadd.f32 %v423, %v568
    %v570 = vpop.f32.mrf.mxu0
    %571 = vmatprep.mubr.f32.mxu0 0.0
    %v572 = vand.u32 %v85, 4294901760
    %v573 = vsub.f32 %v85, %v572
    %574 = vmatmul.mubr.f32.gmra.mxu0 %v573
    %v575 = vpop.f32.mrf.mxu0
    %v576 = vadd.f32 %v429, %v575
    %v577 = vpop.f32.mrf.mxu0
    %578 = vmatprep.mubr.f32.mxu0 0.0
    %v579 = vand.u32 %v87, 4294901760
    %v580 = vsub.f32 %v87, %v579
    %581 = vmatmul.mubr.f32.gmra.mxu0 %v580
    %v582 = vpop.f32.mrf.mxu0
    %v583 = vadd.f32 %v435, %v582
    %v584 = vpop.f32.mrf.mxu0
    %585 = vmatprep.mubr.f32.mxu0 0.0
    %v586 = vand.u32 %v89, 4294901760
    %v587 = vsub.f32 %v89, %v586
    %588 = vmatmul.mubr.f32.gmra.mxu0 %v587
    %v589 = vpop.f32.mrf.mxu0
    %v590 = vadd.f32 %v441, %v589
    %v591 = vpop.f32.mrf.mxu0
    %592 = vmatprep.mubr.f32.mxu0 0.0
    %v593 = vand.u32 %v91, 4294901760
    %v594 = vsub.f32 %v91, %v593
    %595 = vmatmul.mubr.f32.gmra.mxu0 %v594
    %v596 = vpop.f32.mrf.mxu0
    %v597 = vadd.f32 %v447, %v596
    %v598 = vpop.f32.mrf.mxu0
    %599 = vmatprep.mubr.f32.mxu0 0.0
    %v600 = vand.u32 %v93, 4294901760
    %v601 = vsub.f32 %v93, %v600
    %602 = vmatmul.mubr.f32.gmra.mxu0 %v601
    %v603 = vpop.f32.mrf.mxu0
    %v604 = vadd.f32 %v453, %v603
    %v605 = vpop.f32.mrf.mxu0
    %606 = vmatprep.mubr.f32.mxu0 0.0
    %v607 = vand.u32 %v95, 4294901760
    %v608 = vsub.f32 %v95, %v607
    %609 = vmatmul.mubr.f32.gmra.mxu0 %v608
    %v610 = vpop.f32.mrf.mxu0
    %v611 = vadd.f32 %v459, %v610
    %v612 = vpop.f32.mrf.mxu0
    %613 = vmatprep.mubr.f32.mxu0 0.0
    %v614 = vand.u32 %v97, 4294901760
    %v615 = vsub.f32 %v97, %v614
    %616 = vmatmul.mubr.f32.gmra.mxu0 %v615
    %v617 = vpop.f32.mrf.mxu0
    %v618 = vadd.f32 %v465, %v617
    %v619 = vpop.f32.mrf.mxu0
    %620 = vdwg.mxu0
    %621 = vmatprep.subr.mxu0 0.0
    %v622 = vand.u32 %v113, 4294901760
    %623 = vmatpush1.msra.mxu0 %v622
    %624 = vmatprep.subr.mxu0 0.0
    %v625 = vand.u32 %v112, 4294901760
    %626 = vmatpush1.msra.mxu0 %v625
    %627 = vmatprep.subr.mxu0 0.0
    %v628 = vand.u32 %v111, 4294901760
    %629 = vmatpush1.msra.mxu0 %v628
    %630 = vmatprep.subr.mxu0 0.0
    %v631 = vand.u32 %v110, 4294901760
    %632 = vmatpush1.msra.mxu0 %v631
    %633 = vmatprep.subr.mxu0 0.0
    %v634 = vand.u32 %v109, 4294901760
    %635 = vmatpush1.msra.mxu0 %v634
    %636 = vmatprep.subr.mxu0 0.0
    %v637 = vand.u32 %v108, 4294901760
    %638 = vmatpush1.msra.mxu0 %v637
    %639 = vmatprep.subr.mxu0 0.0
    %v640 = vand.u32 %v107, 4294901760
    %641 = vmatpush1.msra.mxu0 %v640
    %642 = vmatprep.subr.mxu0 0.0
    %v643 = vand.u32 %v106, 4294901760
    %644 = vmatpush1.msra.mxu0 %v643
    %645 = vmatprep.subr.mxu0 0.0
    %v646 = vand.u32 %v105, 4294901760
    %647 = vmatpush1.msra.mxu0 %v646
    %648 = vmatprep.subr.mxu0 0.0
    %v649 = vand.u32 %v104, 4294901760
    %650 = vmatpush1.msra.mxu0 %v649
    %651 = vmatprep.subr.mxu0 0.0
    %v652 = vand.u32 %v103, 4294901760
    %653 = vmatpush1.msra.mxu0 %v652
    %654 = vmatprep.subr.mxu0 0.0
    %v655 = vand.u32 %v102, 4294901760
    %656 = vmatpush1.msra.mxu0 %v655
    %657 = vmatprep.subr.mxu0 0.0
    %v658 = vand.u32 %v101, 4294901760
    %659 = vmatpush1.msra.mxu0 %v658
    %660 = vmatprep.subr.mxu0 0.0
    %v661 = vand.u32 %v100, 4294901760
    %662 = vmatpush1.msra.mxu0 %v661
    %663 = vmatprep.subr.mxu0 0.0
    %v664 = vand.u32 %v99, 4294901760
    %665 = vmatpush1.msra.mxu0 %v664
    %666 = vmatprep.subr.mxu0 0.0
    %v667 = vand.u32 %v98, 4294901760
    %668 = vmatpush1.msra.mxu0 %v667
    %669 = vmatprep.subr.mxu0 0.0
    %670 = vmatpush2.msra.mxu0 0.0
    %671 = vmatprep.subr.mxu0 0.0
    %672 = vmatpush2.msra.mxu0 0.0
    %673 = vmatprep.subr.mxu0 0.0
    %674 = vmatpush2.msra.mxu0 0.0
    %675 = vmatprep.subr.mxu0 0.0
    %676 = vmatpush2.msra.mxu0 0.0
    %677 = vmatprep.subr.mxu0 0.0
    %678 = vmatpush2.msra.mxu0 0.0
    %679 = vmatprep.subr.mxu0 0.0
    %680 = vmatpush2.msra.mxu0 0.0
    %681 = vmatprep.subr.mxu0 0.0
    %682 = vmatpush2.msra.mxu0 0.0
    %683 = vmatprep.subr.mxu0 0.0
    %684 = vmatpush2.msra.mxu0 0.0
    %685 = vmatprep.subr.mxu0 0.0
    %686 = vmatpush2.msra.mxu0 0.0
    %687 = vmatprep.subr.mxu0 0.0
    %688 = vmatpush2.msra.mxu0 0.0
    %689 = vmatprep.subr.mxu0 0.0
    %690 = vmatpush2.msra.mxu0 0.0
    %691 = vmatprep.subr.mxu0 0.0
    %692 = vmatpush2.msra.mxu0 0.0
    %693 = vmatprep.subr.mxu0 0.0
    %694 = vmatpush2.msra.mxu0 0.0
    %695 = vmatprep.subr.mxu0 0.0
    %696 = vmatpush2.msra.mxu0 0.0
    %697 = vmatprep.subr.mxu0 0.0
    %698 = vmatpush2.msra.mxu0 0.0
    %699 = vmatprep.subr.mxu0 0.0
    %700 = vmatpush2.msra.mxu0 0.0
    %701 = vmatprep.mubr.f32.mxu0 0.0
    %v702 = vand.u32 %v83, 4294901760
    %v703 = vsub.f32 %v83, %v702
    %v704 = vand.u32 %v703, 4294901760
    %705 = vmatmul.mubr.f32.gmra.mxu0 %v704
    %v706 = vpop.f32.mrf.mxu0
    %v707 = vadd.f32 %v569, %v706
    %v708 = vpop.f32.mrf.mxu0
    %709 = vmatprep.mubr.f32.mxu0 0.0
    %v710 = vand.u32 %v85, 4294901760
    %v711 = vsub.f32 %v85, %v710
    %v712 = vand.u32 %v711, 4294901760
    %713 = vmatmul.mubr.f32.gmra.mxu0 %v712
    %v714 = vpop.f32.mrf.mxu0
    %v715 = vadd.f32 %v576, %v714
    %v716 = vpop.f32.mrf.mxu0
    %717 = vmatprep.mubr.f32.mxu0 0.0
    %v718 = vand.u32 %v87, 4294901760
    %v719 = vsub.f32 %v87, %v718
    %v720 = vand.u32 %v719, 4294901760
    %721 = vmatmul.mubr.f32.gmra.mxu0 %v720
    %v722 = vpop.f32.mrf.mxu0
    %v723 = vadd.f32 %v583, %v722
    %v724 = vpop.f32.mrf.mxu0
    %725 = vmatprep.mubr.f32.mxu0 0.0
    %v726 = vand.u32 %v89, 4294901760
    %v727 = vsub.f32 %v89, %v726
    %v728 = vand.u32 %v727, 4294901760
    %729 = vmatmul.mubr.f32.gmra.mxu0 %v728
    %v730 = vpop.f32.mrf.mxu0
    %v731 = vadd.f32 %v590, %v730
    %v732 = vpop.f32.mrf.mxu0
    %733 = vmatprep.mubr.f32.mxu0 0.0
    %v734 = vand.u32 %v91, 4294901760
    %v735 = vsub.f32 %v91, %v734
    %v736 = vand.u32 %v735, 4294901760
    %737 = vmatmul.mubr.f32.gmra.mxu0 %v736
    %v738 = vpop.f32.mrf.mxu0
    %v739 = vadd.f32 %v597, %v738
    %v740 = vpop.f32.mrf.mxu0
    %741 = vmatprep.mubr.f32.mxu0 0.0
    %v742 = vand.u32 %v93, 4294901760
    %v743 = vsub.f32 %v93, %v742
    %v744 = vand.u32 %v743, 4294901760
    %745 = vmatmul.mubr.f32.gmra.mxu0 %v744
    %v746 = vpop.f32.mrf.mxu0
    %v747 = vadd.f32 %v604, %v746
    %v748 = vpop.f32.mrf.mxu0
    %749 = vmatprep.mubr.f32.mxu0 0.0
    %v750 = vand.u32 %v95, 4294901760
    %v751 = vsub.f32 %v95, %v750
    %v752 = vand.u32 %v751, 4294901760
    %753 = vmatmul.mubr.f32.gmra.mxu0 %v752
    %v754 = vpop.f32.mrf.mxu0
    %v755 = vadd.f32 %v611, %v754
    %v756 = vpop.f32.mrf.mxu0
    %757 = vmatprep.mubr.f32.mxu0 0.0
    %v758 = vand.u32 %v97, 4294901760
    %v759 = vsub.f32 %v97, %v758
    %v760 = vand.u32 %v759, 4294901760
    %761 = vmatmul.mubr.f32.gmra.mxu0 %v760
    %v762 = vpop.f32.mrf.mxu0
    %v763 = vadd.f32 %v618, %v762
    %v764 = vpop.f32.mrf.mxu0
    %765 = vdwg.mxu0
    %766 = vmatprep.subr.mxu0 0.0
    %v767 = vand.u32 %v113, 4294901760
    %v768 = vsub.f32 %v113, %v767
    %v769 = vand.u32 %v768, 4294901760
    %770 = vmatpush1.msra.mxu0 %v769
    %771 = vmatprep.subr.mxu0 0.0
    %v772 = vand.u32 %v112, 4294901760
    %v773 = vsub.f32 %v112, %v772
    %v774 = vand.u32 %v773, 4294901760
    %775 = vmatpush1.msra.mxu0 %v774
    %776 = vmatprep.subr.mxu0 0.0
    %v777 = vand.u32 %v111, 4294901760
    %v778 = vsub.f32 %v111, %v777
    %v779 = vand.u32 %v778, 4294901760
    %780 = vmatpush1.msra.mxu0 %v779
    %781 = vmatprep.subr.mxu0 0.0
    %v782 = vand.u32 %v110, 4294901760
    %v783 = vsub.f32 %v110, %v782
    %v784 = vand.u32 %v783, 4294901760
    %785 = vmatpush1.msra.mxu0 %v784
    %786 = vmatprep.subr.mxu0 0.0
    %v787 = vand.u32 %v109, 4294901760
    %v788 = vsub.f32 %v109, %v787
    %v789 = vand.u32 %v788, 4294901760
    %790 = vmatpush1.msra.mxu0 %v789
    %791 = vmatprep.subr.mxu0 0.0
    %v792 = vand.u32 %v108, 4294901760
    %v793 = vsub.f32 %v108, %v792
    %v794 = vand.u32 %v793, 4294901760
    %795 = vmatpush1.msra.mxu0 %v794
    %796 = vmatprep.subr.mxu0 0.0
    %v797 = vand.u32 %v107, 4294901760
    %v798 = vsub.f32 %v107, %v797
    %v799 = vand.u32 %v798, 4294901760
    %800 = vmatpush1.msra.mxu0 %v799
    %801 = vmatprep.subr.mxu0 0.0
    %v802 = vand.u32 %v106, 4294901760
    %v803 = vsub.f32 %v106, %v802
    %v804 = vand.u32 %v803, 4294901760
    %805 = vmatpush1.msra.mxu0 %v804
    %806 = vmatprep.subr.mxu0 0.0
    %v807 = vand.u32 %v105, 4294901760
    %v808 = vsub.f32 %v105, %v807
    %v809 = vand.u32 %v808, 4294901760
    %810 = vmatpush1.msra.mxu0 %v809
    %811 = vmatprep.subr.mxu0 0.0
    %v812 = vand.u32 %v104, 4294901760
    %v813 = vsub.f32 %v104, %v812
    %v814 = vand.u32 %v813, 4294901760
    %815 = vmatpush1.msra.mxu0 %v814
    %816 = vmatprep.subr.mxu0 0.0
    %v817 = vand.u32 %v103, 4294901760
    %v818 = vsub.f32 %v103, %v817
    %v819 = vand.u32 %v818, 4294901760
    %820 = vmatpush1.msra.mxu0 %v819
    %821 = vmatprep.subr.mxu0 0.0
    %v822 = vand.u32 %v102, 4294901760
    %v823 = vsub.f32 %v102, %v822
    %v824 = vand.u32 %v823, 4294901760
    %825 = vmatpush1.msra.mxu0 %v824
    %826 = vmatprep.subr.mxu0 0.0
    %v827 = vand.u32 %v101, 4294901760
    %v828 = vsub.f32 %v101, %v827
    %v829 = vand.u32 %v828, 4294901760
    %830 = vmatpush1.msra.mxu0 %v829
    %831 = vmatprep.subr.mxu0 0.0
    %v832 = vand.u32 %v100, 4294901760
    %v833 = vsub.f32 %v100, %v832
    %v834 = vand.u32 %v833, 4294901760
    %835 = vmatpush1.msra.mxu0 %v834
    %836 = vmatprep.subr.mxu0 0.0
    %v837 = vand.u32 %v99, 4294901760
    %v838 = vsub.f32 %v99, %v837
    %v839 = vand.u32 %v838, 4294901760
    %840 = vmatpush1.msra.mxu0 %v839
    %841 = vmatprep.subr.mxu0 0.0
    %v842 = vand.u32 %v98, 4294901760
    %v843 = vsub.f32 %v98, %v842
    %v844 = vand.u32 %v843, 4294901760
    %845 = vmatpush1.msra.mxu0 %v844
    %846 = vmatprep.subr.mxu0 0.0
    %847 = vmatpush2.msra.mxu0 0.0
    %848 = vmatprep.subr.mxu0 0.0
    %849 = vmatpush2.msra.mxu0 0.0
    %850 = vmatprep.subr.mxu0 0.0
    %851 = vmatpush2.msra.mxu0 0.0
    %852 = vmatprep.subr.mxu0 0.0
    %853 = vmatpush2.msra.mxu0 0.0
    %854 = vmatprep.subr.mxu0 0.0
    %855 = vmatpush2.msra.mxu0 0.0
    %856 = vmatprep.subr.mxu0 0.0
    %857 = vmatpush2.msra.mxu0 0.0
    %858 = vmatprep.subr.mxu0 0.0
    %859 = vmatpush2.msra.mxu0 0.0
    %860 = vmatprep.subr.mxu0 0.0
    %861 = vmatpush2.msra.mxu0 0.0
    %862 = vmatprep.subr.mxu0 0.0
    %863 = vmatpush2.msra.mxu0 0.0
    %864 = vmatprep.subr.mxu0 0.0
    %865 = vmatpush2.msra.mxu0 0.0
    %866 = vmatprep.subr.mxu0 0.0
    %867 = vmatpush2.msra.mxu0 0.0
    %868 = vmatprep.subr.mxu0 0.0
    %869 = vmatpush2.msra.mxu0 0.0
    %870 = vmatprep.subr.mxu0 0.0
    %871 = vmatpush2.msra.mxu0 0.0
    %872 = vmatprep.subr.mxu0 0.0
    %873 = vmatpush2.msra.mxu0 0.0
    %874 = vmatprep.subr.mxu0 0.0
    %875 = vmatpush2.msra.mxu0 0.0
    %876 = vmatprep.subr.mxu0 0.0
    %877 = vmatpush2.msra.mxu0 0.0
    %878 = vmatprep.mubr.f32.mxu0 0.0
    %v879 = vand.u32 %v83, 4294901760
    %880 = vmatmul.mubr.f32.gmra.mxu0 %v879
    %v881 = vpop.f32.mrf.mxu0
    %v882 = vadd.f32 %v707, %v881
    %v883 = vpop.f32.mrf.mxu0
    %884 = vmatprep.mubr.f32.mxu0 0.0
    %v885 = vand.u32 %v85, 4294901760
    %886 = vmatmul.mubr.f32.gmra.mxu0 %v885
    %v887 = vpop.f32.mrf.mxu0
    %v888 = vadd.f32 %v715, %v887
    %v889 = vpop.f32.mrf.mxu0
    %890 = vmatprep.mubr.f32.mxu0 0.0
    %v891 = vand.u32 %v87, 4294901760
    %892 = vmatmul.mubr.f32.gmra.mxu0 %v891
    %v893 = vpop.f32.mrf.mxu0
    %v894 = vadd.f32 %v723, %v893
    %v895 = vpop.f32.mrf.mxu0
    %896 = vmatprep.mubr.f32.mxu0 0.0
    %v897 = vand.u32 %v89, 4294901760
    %898 = vmatmul.mubr.f32.gmra.mxu0 %v897
    %v899 = vpop.f32.mrf.mxu0
    %v900 = vadd.f32 %v731, %v899
    %v901 = vpop.f32.mrf.mxu0
    %902 = vmatprep.mubr.f32.mxu0 0.0
    %v903 = vand.u32 %v91, 4294901760
    %904 = vmatmul.mubr.f32.gmra.mxu0 %v903
    %v905 = vpop.f32.mrf.mxu0
    %v906 = vadd.f32 %v739, %v905
    %v907 = vpop.f32.mrf.mxu0
    %908 = vmatprep.mubr.f32.mxu0 0.0
    %v909 = vand.u32 %v93, 4294901760
    %910 = vmatmul.mubr.f32.gmra.mxu0 %v909
    %v911 = vpop.f32.mrf.mxu0
    %v912 = vadd.f32 %v747, %v911
    %v913 = vpop.f32.mrf.mxu0
    %914 = vmatprep.mubr.f32.mxu0 0.0
    %v915 = vand.u32 %v95, 4294901760
    %916 = vmatmul.mubr.f32.gmra.mxu0 %v915
    %v917 = vpop.f32.mrf.mxu0
    %v918 = vadd.f32 %v755, %v917
    %v919 = vpop.f32.mrf.mxu0
    %920 = vmatprep.mubr.f32.mxu0 0.0
    %v921 = vand.u32 %v97, 4294901760
    %922 = vmatmul.mubr.f32.gmra.mxu0 %v921
    %v923 = vpop.f32.mrf.mxu0
    %v924 = vadd.f32 %v763, %v923
    %v925 = vpop.f32.mrf.mxu0
    %926 = vdwg.mxu0
    %927 = vmatprep.subr.mxu0 0.0
    %v928 = vand.u32 %v113, 4294901760
    %929 = vmatpush1.msra.mxu0 %v928
    %930 = vmatprep.subr.mxu0 0.0
    %v931 = vand.u32 %v112, 4294901760
    %932 = vmatpush1.msra.mxu0 %v931
    %933 = vmatprep.subr.mxu0 0.0
    %v934 = vand.u32 %v111, 4294901760
    %935 = vmatpush1.msra.mxu0 %v934
    %936 = vmatprep.subr.mxu0 0.0
    %v937 = vand.u32 %v110, 4294901760
    %938 = vmatpush1.msra.mxu0 %v937
    %939 = vmatprep.subr.mxu0 0.0
    %v940 = vand.u32 %v109, 4294901760
    %941 = vmatpush1.msra.mxu0 %v940
    %942 = vmatprep.subr.mxu0 0.0
    %v943 = vand.u32 %v108, 4294901760
    %944 = vmatpush1.msra.mxu0 %v943
    %945 = vmatprep.subr.mxu0 0.0
    %v946 = vand.u32 %v107, 4294901760
    %947 = vmatpush1.msra.mxu0 %v946
    %948 = vmatprep.subr.mxu0 0.0
    %v949 = vand.u32 %v106, 4294901760
    %950 = vmatpush1.msra.mxu0 %v949
    %951 = vmatprep.subr.mxu0 0.0
    %v952 = vand.u32 %v105, 4294901760
    %953 = vmatpush1.msra.mxu0 %v952
    %954 = vmatprep.subr.mxu0 0.0
    %v955 = vand.u32 %v104, 4294901760
    %956 = vmatpush1.msra.mxu0 %v955
    %957 = vmatprep.subr.mxu0 0.0
    %v958 = vand.u32 %v103, 4294901760
    %959 = vmatpush1.msra.mxu0 %v958
    %960 = vmatprep.subr.mxu0 0.0
    %v961 = vand.u32 %v102, 4294901760
    %962 = vmatpush1.msra.mxu0 %v961
    %963 = vmatprep.subr.mxu0 0.0
    %v964 = vand.u32 %v101, 4294901760
    %965 = vmatpush1.msra.mxu0 %v964
    %966 = vmatprep.subr.mxu0 0.0
    %v967 = vand.u32 %v100, 4294901760
    %968 = vmatpush1.msra.mxu0 %v967
    %969 = vmatprep.subr.mxu0 0.0
    %v970 = vand.u32 %v99, 4294901760
    %971 = vmatpush1.msra.mxu0 %v970
    %972 = vmatprep.subr.mxu0 0.0
    %v973 = vand.u32 %v98, 4294901760
    %974 = vmatpush1.msra.mxu0 %v973
    %975 = vmatprep.subr.mxu0 0.0
    %976 = vmatpush2.msra.mxu0 0.0
    %977 = vmatprep.subr.mxu0 0.0
    %978 = vmatpush2.msra.mxu0 0.0
    %979 = vmatprep.subr.mxu0 0.0
    %980 = vmatpush2.msra.mxu0 0.0
    %981 = vmatprep.subr.mxu0 0.0
    %982 = vmatpush2.msra.mxu0 0.0
    %983 = vmatprep.subr.mxu0 0.0
    %984 = vmatpush2.msra.mxu0 0.0
    %985 = vmatprep.subr.mxu0 0.0
    %986 = vmatpush2.msra.mxu0 0.0
    %987 = vmatprep.subr.mxu0 0.0
    %988 = vmatpush2.msra.mxu0 0.0
    %989 = vmatprep.subr.mxu0 0.0
    %990 = vmatpush2.msra.mxu0 0.0
    %991 = vmatprep.subr.mxu0 0.0
    %992 = vmatpush2.msra.mxu0 0.0
    %993 = vmatprep.subr.mxu0 0.0
    %994 = vmatpush2.msra.mxu0 0.0
    %995 = vmatprep.subr.mxu0 0.0
    %996 = vmatpush2.msra.mxu0 0.0
    %997 = vmatprep.subr.mxu0 0.0
    %998 = vmatpush2.msra.mxu0 0.0
    %999 = vmatprep.subr.mxu0 0.0
    %1000 = vmatpush2.msra.mxu0 0.0
    %1001 = vmatprep.subr.mxu0 0.0
    %1002 = vmatpush2.msra.mxu0 0.0
    %1003 = vmatprep.subr.mxu0 0.0
    %1004 = vmatpush2.msra.mxu0 0.0
    %1005 = vmatprep.subr.mxu0 0.0
    %1006 = vmatpush2.msra.mxu0 0.0
    %1007 = vmatprep.mubr.f32.mxu0 0.0
    %v1008 = vand.u32 %v83, 4294901760
    %1009 = vmatmul.mubr.f32.gmra.mxu0 %v1008
    %v1010 = vpop.f32.mrf.mxu0
    %v1011 = vadd.f32 %v882, %v1010
    %v1012 = vpop.f32.mrf.mxu0
    %1013 = vmatprep.mubr.f32.mxu0 0.0
    %v1014 = vand.u32 %v85, 4294901760
    %1015 = vmatmul.mubr.f32.gmra.mxu0 %v1014
    %v1016 = vpop.f32.mrf.mxu0
    %v1017 = vadd.f32 %v888, %v1016
    %v1018 = vpop.f32.mrf.mxu0
    %1019 = vmatprep.mubr.f32.mxu0 0.0
    %v1020 = vand.u32 %v87, 4294901760
    %1021 = vmatmul.mubr.f32.gmra.mxu0 %v1020
    %v1022 = vpop.f32.mrf.mxu0
    %v1023 = vadd.f32 %v894, %v1022
    %v1024 = vpop.f32.mrf.mxu0
    %1025 = vmatprep.mubr.f32.mxu0 0.0
    %v1026 = vand.u32 %v89, 4294901760
    %1027 = vmatmul.mubr.f32.gmra.mxu0 %v1026
    %v1028 = vpop.f32.mrf.mxu0
    %v1029 = vadd.f32 %v900, %v1028
    %v1030 = vpop.f32.mrf.mxu0
    %1031 = vmatprep.mubr.f32.mxu0 0.0
    %v1032 = vand.u32 %v91, 4294901760
    %1033 = vmatmul.mubr.f32.gmra.mxu0 %v1032
    %v1034 = vpop.f32.mrf.mxu0
    %v1035 = vadd.f32 %v906, %v1034
    %v1036 = vpop.f32.mrf.mxu0
    %1037 = vmatprep.mubr.f32.mxu0 0.0
    %v1038 = vand.u32 %v93, 4294901760
    %1039 = vmatmul.mubr.f32.gmra.mxu0 %v1038
    %v1040 = vpop.f32.mrf.mxu0
    %v1041 = vadd.f32 %v912, %v1040
    %v1042 = vpop.f32.mrf.mxu0
    %1043 = vmatprep.mubr.f32.mxu0 0.0
    %v1044 = vand.u32 %v95, 4294901760
    %1045 = vmatmul.mubr.f32.gmra.mxu0 %v1044
    %v1046 = vpop.f32.mrf.mxu0
    %v1047 = vadd.f32 %v918, %v1046
    %v1048 = vpop.f32.mrf.mxu0
    %1049 = vmatprep.mubr.f32.mxu0 0.0
    %v1050 = vand.u32 %v97, 4294901760
    %1051 = vmatmul.mubr.f32.gmra.mxu0 %v1050
    %v1052 = vpop.f32.mrf.mxu0
    %v1053 = vadd.f32 %v924, %v1052
    %v1054 = vpop.f32.mrf.mxu0
    %1055 = vdwg.mxu0
    %v1056 = vmax.f32 %v1011, 1e-30
    %v1057 = vmax.f32 %v1017, 1e-30
    %v1058 = vmax.f32 %v1023, 1e-30
    %v1059 = vmax.f32 %v1029, 1e-30
    %v1060 = vmax.f32 %v1035, 1e-30
    %v1061 = vmax.f32 %v1041, 1e-30
    %v1062 = vmax.f32 %v1047, 1e-30
    %v1063 = vmax.f32 %v1053, 1e-30
    %v1064 = vlog2.pop %v1056
    %v1065 = vmul.f32 %v1064, 0.6931472
    %v1066 = vlog2.pop %v1057
    %v1067 = vmul.f32 %v1066, 0.6931472
    %v1068 = vlog2.pop %v1058
    %v1069 = vmul.f32 %v1068, 0.6931472
    %v1070 = vlog2.pop %v1059
    %v1071 = vmul.f32 %v1070, 0.6931472
    %v1072 = vlog2.pop %v1060
    %v1073 = vmul.f32 %v1072, 0.6931472
    %v1074 = vlog2.pop %v1061
    %v1075 = vmul.f32 %v1074, 0.6931472
    %v1076 = vlog2.pop %v1062
    %v1077 = vmul.f32 %v1076, 0.6931472
    %v1078 = vlog2.pop %v1063
    %v1079 = vmul.f32 %v1078, 0.6931472
    %v1080 = vadd.f32 %v59, %v1065
    %v1081 = vadd.f32 %v61, %v1067
    %v1082 = vadd.f32 %v63, %v1069
    %v1083 = vadd.f32 %v65, %v1071
    %v1084 = vadd.f32 %v67, %v1073
    %v1085 = vadd.f32 %v69, %v1075
    %v1086 = vadd.f32 %v71, %v1077
    %v1087 = vadd.f32 %v73, %v1079
    %v1088 = vld [vmem:[#allocation3] sm:$0xff]
    %v1089 = vld [vmem:[#allocation3 + $0x8] sm:$0xff]
    %v1090 = vld [vmem:[#allocation3 + $0x10] sm:$0xff]
    %v1091 = vld [vmem:[#allocation3 + $0x18] sm:$0xff]
    %v1092 = vld [vmem:[#allocation3 + $0x20] sm:$0xff]
    %v1093 = vld [vmem:[#allocation3 + $0x28] sm:$0xff]
    %v1094 = vld [vmem:[#allocation3 + $0x30] sm:$0xff]
    %v1095 = vld [vmem:[#allocation3 + $0x38] sm:$0xff]
    %vm1096 = vcmp.lt.f32.partialorder %v50, 128.0
    %vm1097 = vcmp.lt.f32.partialorder %v51, 128.0
    %vm1098 = vcmp.lt.f32.partialorder %v52, 128.0
    %vm1099 = vcmp.lt.f32.partialorder %v53, 128.0
    %vm1100 = vcmp.lt.f32.partialorder %v54, 128.0
    %vm1101 = vcmp.lt.f32.partialorder %v55, 128.0
    %vm1102 = vcmp.lt.f32.partialorder %v56, 128.0
    %vm1103 = vcmp.lt.f32.partialorder %v57, 128.0
    %v1104 = vsel %vm1096, %v1080, 0.0
    %v1105 = vsel %vm1097, %v1081, 0.0
    %v1106 = vsel %vm1098, %v1082, 0.0
    %v1107 = vsel %vm1099, %v1083, 0.0
    %v1108 = vsel %vm1100, %v1084, 0.0
    %v1109 = vsel %vm1101, %v1085, 0.0
    %v1110 = vsel %vm1102, %v1086, 0.0
    %v1111 = vsel %vm1103, %v1087, 0.0
    %v1112 = vadd.f32 %v1088, %v1104
    %v1113 = vadd.f32 %v1089, %v1105
    %v1114 = vadd.f32 %v1090, %v1106
    %v1115 = vadd.f32 %v1091, %v1107
    %v1116 = vadd.f32 %v1092, %v1108
    %v1117 = vadd.f32 %v1093, %v1109
    %v1118 = vadd.f32 %v1094, %v1110
    %v1119 = vadd.f32 %v1095, %v1111
    %vm1120 = vcmask 64512
    %1121 = vst.msk [vmem:[#allocation3] sm:$0xff] %vm1120, %v1112
    %1122 = vst.msk [vmem:[#allocation3 + $0x8] sm:$0xff] %vm1120, %v1113
    %1123 = vst.msk [vmem:[#allocation3 + $0x10] sm:$0xff] %vm1120, %v1114
    %1124 = vst.msk [vmem:[#allocation3 + $0x18] sm:$0xff] %vm1120, %v1115
    %1125 = vst.msk [vmem:[#allocation3 + $0x20] sm:$0xff] %vm1120, %v1116
    %1126 = vst.msk [vmem:[#allocation3 + $0x28] sm:$0xff] %vm1120, %v1117
    %1127 = vst.msk [vmem:[#allocation3 + $0x30] sm:$0xff] %vm1120, %v1118
    %1128 = vst.msk [vmem:[#allocation3 + $0x38] sm:$0xff] %vm1120, %v1119
    %v1129 = vld [vmem:[%s3] sm:$0xff]
    %v1131 = vsel %vm1120, %v50, 0
    %v1134 = vsel %vm1120, %v51, 0
    %v1137 = vsel %vm1120, %v52, 0
    %v1140 = vsel %vm1120, %v53, 0
    %v1143 = vsel %vm1120, %v54, 0
    %v1146 = vsel %vm1120, %v55, 0
    %v1149 = vsel %vm1120, %v56, 0
    %v1152 = vsel %vm1120, %v57, 0
    %1154 = vmatprep.subr.mxu0 0.0
    %1155 = vmatpush1.msra.mxu0 0.0
    %1156 = vmatprep.subr.mxu0 0.0
    %1157 = vmatpush1.msra.mxu0 0.0
    %1158 = vmatprep.subr.mxu0 0.0
    %1159 = vmatpush1.msra.mxu0 0.0
    %1160 = vmatprep.subr.mxu0 0.0
    %1161 = vmatpush1.msra.mxu0 0.0
    %1162 = vmatprep.subr.mxu0 0.0
    %1163 = vmatpush1.msra.mxu0 0.0
    %1164 = vmatprep.subr.mxu0 0.0
    %1165 = vmatpush1.msra.mxu0 0.0
    %1166 = vmatprep.subr.mxu0 0.0
    %1167 = vmatpush1.msra.mxu0 0.0
    %1168 = vmatprep.subr.mxu0 0.0
    %1169 = vmatpush1.msra.mxu0 0.0
    %1170 = vmatprep.subr.mxu0 0.0
    %1171 = vmatpush1.msra.mxu0 0.0
    %1172 = vmatprep.subr.mxu0 0.0
    %1173 = vmatpush1.msra.mxu0 0.0
    %1174 = vmatprep.subr.mxu0 0.0
    %1175 = vmatpush1.msra.mxu0 0.0
    %1176 = vmatprep.subr.mxu0 0.0
    %1177 = vmatpush1.msra.mxu0 0.0
    %1178 = vmatprep.subr.mxu0 0.0
    %1179 = vmatpush1.msra.mxu0 0.0
    %1180 = vmatprep.subr.mxu0 0.0
    %1181 = vmatpush1.msra.mxu0 0.0
    %1182 = vmatprep.subr.mxu0 0.0
    %1183 = vmatpush1.msra.mxu0 0.0
    %1184 = vmatprep.subr.mxu0 0.0
    %v1185 = vand.u32 %v1129, 4294901760
    %1186 = vmatpush1.msra.mxu0 %v1185
    %1187 = vmatprep.subr.mxu0 0.0
    %1188 = vmatpush2.msra.mxu0 0.0
    %1189 = vmatprep.subr.mxu0 0.0
    %1190 = vmatpush2.msra.mxu0 0.0
    %1191 = vmatprep.subr.mxu0 0.0
    %1192 = vmatpush2.msra.mxu0 0.0
    %1193 = vmatprep.subr.mxu0 0.0
    %1194 = vmatpush2.msra.mxu0 0.0
    %1195 = vmatprep.subr.mxu0 0.0
    %1196 = vmatpush2.msra.mxu0 0.0
    %1197 = vmatprep.subr.mxu0 0.0
    %1198 = vmatpush2.msra.mxu0 0.0
    %1199 = vmatprep.subr.mxu0 0.0
    %1200 = vmatpush2.msra.mxu0 0.0
    %1201 = vmatprep.subr.mxu0 0.0
    %1202 = vmatpush2.msra.mxu0 0.0
    %1203 = vmatprep.subr.mxu0 0.0
    %1204 = vmatpush2.msra.mxu0 0.0
    %1205 = vmatprep.subr.mxu0 0.0
    %1206 = vmatpush2.msra.mxu0 0.0
    %1207 = vmatprep.subr.mxu0 0.0
    %1208 = vmatpush2.msra.mxu0 0.0
    %1209 = vmatprep.subr.mxu0 0.0
    %1210 = vmatpush2.msra.mxu0 0.0
    %1211 = vmatprep.subr.mxu0 0.0
    %1212 = vmatpush2.msra.mxu0 0.0
    %1213 = vmatprep.subr.mxu0 0.0
    %1214 = vmatpush2.msra.mxu0 0.0
    %1215 = vmatprep.subr.mxu0 0.0
    %1216 = vmatpush2.msra.mxu0 0.0
    %1217 = vmatprep.subr.mxu0 0.0
    %1218 = vmatpush2.msra.mxu0 0.0
    %1219 = vmatprep.mubr.f32.mxu0 0.0
    %v1220 = vand.u32 %v1131, 4294901760
    %v1221 = vsub.f32 %v1131, %v1220
    %v1222 = vand.u32 %v1221, 4294901760
    %v1223 = vsub.f32 %v1221, %v1222
    %v1224 = vand.u32 %v1223, 4294901760
    %1225 = vmatmul.mubr.f32.gmra.mxu0 %v1224
    %v1226 = vpop.f32.mrf.mxu0
    %v1227 = vadd.f32 0.0, %v1226
    %v1228 = vpop.f32.mrf.mxu0
    %1229 = vmatprep.mubr.f32.mxu0 0.0
    %v1230 = vand.u32 %v1134, 4294901760
    %v1231 = vsub.f32 %v1134, %v1230
    %v1232 = vand.u32 %v1231, 4294901760
    %v1233 = vsub.f32 %v1231, %v1232
    %v1234 = vand.u32 %v1233, 4294901760
    %1235 = vmatmul.mubr.f32.gmra.mxu0 %v1234
    %v1236 = vpop.f32.mrf.mxu0
    %v1237 = vadd.f32 0.0, %v1236
    %v1238 = vpop.f32.mrf.mxu0
    %1239 = vmatprep.mubr.f32.mxu0 0.0
    %v1240 = vand.u32 %v1137, 4294901760
    %v1241 = vsub.f32 %v1137, %v1240
    %v1242 = vand.u32 %v1241, 4294901760
    %v1243 = vsub.f32 %v1241, %v1242
    %v1244 = vand.u32 %v1243, 4294901760
    %1245 = vmatmul.mubr.f32.gmra.mxu0 %v1244
    %v1246 = vpop.f32.mrf.mxu0
    %v1247 = vadd.f32 0.0, %v1246
    %v1248 = vpop.f32.mrf.mxu0
    %1249 = vmatprep.mubr.f32.mxu0 0.0
    %v1250 = vand.u32 %v1140, 4294901760
    %v1251 = vsub.f32 %v1140, %v1250
    %v1252 = vand.u32 %v1251, 4294901760
    %v1253 = vsub.f32 %v1251, %v1252
    %v1254 = vand.u32 %v1253, 4294901760
    %1255 = vmatmul.mubr.f32.gmra.mxu0 %v1254
    %v1256 = vpop.f32.mrf.mxu0
    %v1257 = vadd.f32 0.0, %v1256
    %v1258 = vpop.f32.mrf.mxu0
    %1259 = vmatprep.mubr.f32.mxu0 0.0
    %v1260 = vand.u32 %v1143, 4294901760
    %v1261 = vsub.f32 %v1143, %v1260
    %v1262 = vand.u32 %v1261, 4294901760
    %v1263 = vsub.f32 %v1261, %v1262
    %v1264 = vand.u32 %v1263, 4294901760
    %1265 = vmatmul.mubr.f32.gmra.mxu0 %v1264
    %v1266 = vpop.f32.mrf.mxu0
    %v1267 = vadd.f32 0.0, %v1266
    %v1268 = vpop.f32.mrf.mxu0
    %1269 = vmatprep.mubr.f32.mxu0 0.0
    %v1270 = vand.u32 %v1146, 4294901760
    %v1271 = vsub.f32 %v1146, %v1270
    %v1272 = vand.u32 %v1271, 4294901760
    %v1273 = vsub.f32 %v1271, %v1272
    %v1274 = vand.u32 %v1273, 4294901760
    %1275 = vmatmul.mubr.f32.gmra.mxu0 %v1274
    %v1276 = vpop.f32.mrf.mxu0
    %v1277 = vadd.f32 0.0, %v1276
    %v1278 = vpop.f32.mrf.mxu0
    %1279 = vmatprep.mubr.f32.mxu0 0.0
    %v1280 = vand.u32 %v1149, 4294901760
    %v1281 = vsub.f32 %v1149, %v1280
    %v1282 = vand.u32 %v1281, 4294901760
    %v1283 = vsub.f32 %v1281, %v1282
    %v1284 = vand.u32 %v1283, 4294901760
    %1285 = vmatmul.mubr.f32.gmra.mxu0 %v1284
    %v1286 = vpop.f32.mrf.mxu0
    %v1287 = vadd.f32 0.0, %v1286
    %v1288 = vpop.f32.mrf.mxu0
    %1289 = vmatprep.mubr.f32.mxu0 0.0
    %v1290 = vand.u32 %v1152, 4294901760
    %v1291 = vsub.f32 %v1152, %v1290
    %v1292 = vand.u32 %v1291, 4294901760
    %v1293 = vsub.f32 %v1291, %v1292
    %v1294 = vand.u32 %v1293, 4294901760
    %1295 = vmatmul.mubr.f32.gmra.mxu0 %v1294
    %v1296 = vpop.f32.mrf.mxu0
    %v1297 = vadd.f32 0.0, %v1296
    %v1298 = vpop.f32.mrf.mxu0
    %1299 = vdwg.mxu0
    %1300 = vmatprep.subr.mxu0 0.0
    %1301 = vmatpush1.msra.mxu0 0.0
    %1302 = vmatprep.subr.mxu0 0.0
    %1303 = vmatpush1.msra.mxu0 0.0
    %1304 = vmatprep.subr.mxu0 0.0
    %1305 = vmatpush1.msra.mxu0 0.0
    %1306 = vmatprep.subr.mxu0 0.0
    %1307 = vmatpush1.msra.mxu0 0.0
    %1308 = vmatprep.subr.mxu0 0.0
    %1309 = vmatpush1.msra.mxu0 0.0
    %1310 = vmatprep.subr.mxu0 0.0
    %1311 = vmatpush1.msra.mxu0 0.0
    %1312 = vmatprep.subr.mxu0 0.0
    %1313 = vmatpush1.msra.mxu0 0.0
    %1314 = vmatprep.subr.mxu0 0.0
    %1315 = vmatpush1.msra.mxu0 0.0
    %1316 = vmatprep.subr.mxu0 0.0
    %1317 = vmatpush1.msra.mxu0 0.0
    %1318 = vmatprep.subr.mxu0 0.0
    %1319 = vmatpush1.msra.mxu0 0.0
    %1320 = vmatprep.subr.mxu0 0.0
    %1321 = vmatpush1.msra.mxu0 0.0
    %1322 = vmatprep.subr.mxu0 0.0
    %1323 = vmatpush1.msra.mxu0 0.0
    %1324 = vmatprep.subr.mxu0 0.0
    %1325 = vmatpush1.msra.mxu0 0.0
    %1326 = vmatprep.subr.mxu0 0.0
    %1327 = vmatpush1.msra.mxu0 0.0
    %1328 = vmatprep.subr.mxu0 0.0
    %1329 = vmatpush1.msra.mxu0 0.0
    %1330 = vmatprep.subr.mxu0 0.0
    %v1331 = vand.u32 %v1129, 4294901760
    %v1332 = vsub.f32 %v1129, %v1331
    %v1333 = vand.u32 %v1332, 4294901760
    %v1334 = vsub.f32 %v1332, %v1333
    %v1335 = vand.u32 %v1334, 4294901760
    %1336 = vmatpush1.msra.mxu0 %v1335
    %1337 = vmatprep.subr.mxu0 0.0
    %1338 = vmatpush2.msra.mxu0 0.0
    %1339 = vmatprep.subr.mxu0 0.0
    %1340 = vmatpush2.msra.mxu0 0.0
    %1341 = vmatprep.subr.mxu0 0.0
    %1342 = vmatpush2.msra.mxu0 0.0
    %1343 = vmatprep.subr.mxu0 0.0
    %1344 = vmatpush2.msra.mxu0 0.0
    %1345 = vmatprep.subr.mxu0 0.0
    %1346 = vmatpush2.msra.mxu0 0.0
    %1347 = vmatprep.subr.mxu0 0.0
    %1348 = vmatpush2.msra.mxu0 0.0
    %1349 = vmatprep.subr.mxu0 0.0
    %1350 = vmatpush2.msra.mxu0 0.0
    %1351 = vmatprep.subr.mxu0 0.0
    %1352 = vmatpush2.msra.mxu0 0.0
    %1353 = vmatprep.subr.mxu0 0.0
    %1354 = vmatpush2.msra.mxu0 0.0
    %1355 = vmatprep.subr.mxu0 0.0
    %1356 = vmatpush2.msra.mxu0 0.0
    %1357 = vmatprep.subr.mxu0 0.0
    %1358 = vmatpush2.msra.mxu0 0.0
    %1359 = vmatprep.subr.mxu0 0.0
    %1360 = vmatpush2.msra.mxu0 0.0
    %1361 = vmatprep.subr.mxu0 0.0
    %1362 = vmatpush2.msra.mxu0 0.0
    %1363 = vmatprep.subr.mxu0 0.0
    %1364 = vmatpush2.msra.mxu0 0.0
    %1365 = vmatprep.subr.mxu0 0.0
    %1366 = vmatpush2.msra.mxu0 0.0
    %1367 = vmatprep.subr.mxu0 0.0
    %1368 = vmatpush2.msra.mxu0 0.0
    %1369 = vmatprep.mubr.f32.mxu0 0.0
    %v1370 = vand.u32 %v1131, 4294901760
    %1371 = vmatmul.mubr.f32.gmra.mxu0 %v1370
    %v1372 = vpop.f32.mrf.mxu0
    %v1373 = vadd.f32 %v1227, %v1372
    %v1374 = vpop.f32.mrf.mxu0
    %1375 = vmatprep.mubr.f32.mxu0 0.0
    %v1376 = vand.u32 %v1134, 4294901760
    %1377 = vmatmul.mubr.f32.gmra.mxu0 %v1376
    %v1378 = vpop.f32.mrf.mxu0
    %v1379 = vadd.f32 %v1237, %v1378
    %v1380 = vpop.f32.mrf.mxu0
    %1381 = vmatprep.mubr.f32.mxu0 0.0
    %v1382 = vand.u32 %v1137, 4294901760
    %1383 = vmatmul.mubr.f32.gmra.mxu0 %v1382
    %v1384 = vpop.f32.mrf.mxu0
    %v1385 = vadd.f32 %v1247, %v1384
    %v1386 = vpop.f32.mrf.mxu0
    %1387 = vmatprep.mubr.f32.mxu0 0.0
    %v1388 = vand.u32 %v1140, 4294901760
    %1389 = vmatmul.mubr.f32.gmra.mxu0 %v1388
    %v1390 = vpop.f32.mrf.mxu0
    %v1391 = vadd.f32 %v1257, %v1390
    %v1392 = vpop.f32.mrf.mxu0
    %1393 = vmatprep.mubr.f32.mxu0 0.0
    %v1394 = vand.u32 %v1143, 4294901760
    %1395 = vmatmul.mubr.f32.gmra.mxu0 %v1394
    %v1396 = vpop.f32.mrf.mxu0
    %v1397 = vadd.f32 %v1267, %v1396
    %v1398 = vpop.f32.mrf.mxu0
    %1399 = vmatprep.mubr.f32.mxu0 0.0
    %v1400 = vand.u32 %v1146, 4294901760
    %1401 = vmatmul.mubr.f32.gmra.mxu0 %v1400
    %v1402 = vpop.f32.mrf.mxu0
    %v1403 = vadd.f32 %v1277, %v1402
    %v1404 = vpop.f32.mrf.mxu0
    %1405 = vmatprep.mubr.f32.mxu0 0.0
    %v1406 = vand.u32 %v1149, 4294901760
    %1407 = vmatmul.mubr.f32.gmra.mxu0 %v1406
    %v1408 = vpop.f32.mrf.mxu0
    %v1409 = vadd.f32 %v1287, %v1408
    %v1410 = vpop.f32.mrf.mxu0
    %1411 = vmatprep.mubr.f32.mxu0 0.0
    %v1412 = vand.u32 %v1152, 4294901760
    %1413 = vmatmul.mubr.f32.gmra.mxu0 %v1412
    %v1414 = vpop.f32.mrf.mxu0
    %v1415 = vadd.f32 %v1297, %v1414
    %v1416 = vpop.f32.mrf.mxu0
    %1417 = vdwg.mxu0
    %1418 = vmatprep.subr.mxu0 0.0
    %1419 = vmatpush1.msra.mxu0 0.0
    %1420 = vmatprep.subr.mxu0 0.0
    %1421 = vmatpush1.msra.mxu0 0.0
    %1422 = vmatprep.subr.mxu0 0.0
    %1423 = vmatpush1.msra.mxu0 0.0
    %1424 = vmatprep.subr.mxu0 0.0
    %1425 = vmatpush1.msra.mxu0 0.0
    %1426 = vmatprep.subr.mxu0 0.0
    %1427 = vmatpush1.msra.mxu0 0.0
    %1428 = vmatprep.subr.mxu0 0.0
    %1429 = vmatpush1.msra.mxu0 0.0
    %1430 = vmatprep.subr.mxu0 0.0
    %1431 = vmatpush1.msra.mxu0 0.0
    %1432 = vmatprep.subr.mxu0 0.0
    %1433 = vmatpush1.msra.mxu0 0.0
    %1434 = vmatprep.subr.mxu0 0.0
    %1435 = vmatpush1.msra.mxu0 0.0
    %1436 = vmatprep.subr.mxu0 0.0
    %1437 = vmatpush1.msra.mxu0 0.0
    %1438 = vmatprep.subr.mxu0 0.0
    %1439 = vmatpush1.msra.mxu0 0.0
    %1440 = vmatprep.subr.mxu0 0.0
    %1441 = vmatpush1.msra.mxu0 0.0
    %1442 = vmatprep.subr.mxu0 0.0
    %1443 = vmatpush1.msra.mxu0 0.0
    %1444 = vmatprep.subr.mxu0 0.0
    %1445 = vmatpush1.msra.mxu0 0.0
    %1446 = vmatprep.subr.mxu0 0.0
    %1447 = vmatpush1.msra.mxu0 0.0
    %1448 = vmatprep.subr.mxu0 0.0
    %v1449 = vand.u32 %v1129, 4294901760
    %v1450 = vsub.f32 %v1129, %v1449
    %1451 = vmatpush1.msra.mxu0 %v1450
    %1452 = vmatprep.subr.mxu0 0.0
    %1453 = vmatpush2.msra.mxu0 0.0
    %1454 = vmatprep.subr.mxu0 0.0
    %1455 = vmatpush2.msra.mxu0 0.0
    %1456 = vmatprep.subr.mxu0 0.0
    %1457 = vmatpush2.msra.mxu0 0.0
    %1458 = vmatprep.subr.mxu0 0.0
    %1459 = vmatpush2.msra.mxu0 0.0
    %1460 = vmatprep.subr.mxu0 0.0
    %1461 = vmatpush2.msra.mxu0 0.0
    %1462 = vmatprep.subr.mxu0 0.0
    %1463 = vmatpush2.msra.mxu0 0.0
    %1464 = vmatprep.subr.mxu0 0.0
    %1465 = vmatpush2.msra.mxu0 0.0
    %1466 = vmatprep.subr.mxu0 0.0
    %1467 = vmatpush2.msra.mxu0 0.0
    %1468 = vmatprep.subr.mxu0 0.0
    %1469 = vmatpush2.msra.mxu0 0.0
    %1470 = vmatprep.subr.mxu0 0.0
    %1471 = vmatpush2.msra.mxu0 0.0
    %1472 = vmatprep.subr.mxu0 0.0
    %1473 = vmatpush2.msra.mxu0 0.0
    %1474 = vmatprep.subr.mxu0 0.0
    %1475 = vmatpush2.msra.mxu0 0.0
    %1476 = vmatprep.subr.mxu0 0.0
    %1477 = vmatpush2.msra.mxu0 0.0
    %1478 = vmatprep.subr.mxu0 0.0
    %1479 = vmatpush2.msra.mxu0 0.0
    %1480 = vmatprep.subr.mxu0 0.0
    %1481 = vmatpush2.msra.mxu0 0.0
    %1482 = vmatprep.subr.mxu0 0.0
    %1483 = vmatpush2.msra.mxu0 0.0
    %1484 = vmatprep.mubr.f32.mxu0 0.0
    %v1485 = vand.u32 %v1131, 4294901760
    %v1486 = vsub.f32 %v1131, %v1485
    %1487 = vmatmul.mubr.f32.gmra.mxu0 %v1486
    %v1488 = vpop.f32.mrf.mxu0
    %v1489 = vadd.f32 %v1373, %v1488
    %v1490 = vpop.f32.mrf.mxu0
    %1491 = vmatprep.mubr.f32.mxu0 0.0
    %v1492 = vand.u32 %v1134, 4294901760
    %v1493 = vsub.f32 %v1134, %v1492
    %1494 = vmatmul.mubr.f32.gmra.mxu0 %v1493
    %v1495 = vpop.f32.mrf.mxu0
    %v1496 = vadd.f32 %v1379, %v1495
    %v1497 = vpop.f32.mrf.mxu0
    %1498 = vmatprep.mubr.f32.mxu0 0.0
    %v1499 = vand.u32 %v1137, 4294901760
    %v1500 = vsub.f32 %v1137, %v1499
    %1501 = vmatmul.mubr.f32.gmra.mxu0 %v1500
    %v1502 = vpop.f32.mrf.mxu0
    %v1503 = vadd.f32 %v1385, %v1502
    %v1504 = vpop.f32.mrf.mxu0
    %1505 = vmatprep.mubr.f32.mxu0 0.0
    %v1506 = vand.u32 %v1140, 4294901760
    %v1507 = vsub.f32 %v1140, %v1506
    %1508 = vmatmul.mubr.f32.gmra.mxu0 %v1507
    %v1509 = vpop.f32.mrf.mxu0
    %v1510 = vadd.f32 %v1391, %v1509
    %v1511 = vpop.f32.mrf.mxu0
    %1512 = vmatprep.mubr.f32.mxu0 0.0
    %v1513 = vand.u32 %v1143, 4294901760
    %v1514 = vsub.f32 %v1143, %v1513
    %1515 = vmatmul.mubr.f32.gmra.mxu0 %v1514
    %v1516 = vpop.f32.mrf.mxu0
    %v1517 = vadd.f32 %v1397, %v1516
    %v1518 = vpop.f32.mrf.mxu0
    %1519 = vmatprep.mubr.f32.mxu0 0.0
    %v1520 = vand.u32 %v1146, 4294901760
    %v1521 = vsub.f32 %v1146, %v1520
    %1522 = vmatmul.mubr.f32.gmra.mxu0 %v1521
    %v1523 = vpop.f32.mrf.mxu0
    %v1524 = vadd.f32 %v1403, %v1523
    %v1525 = vpop.f32.mrf.mxu0
    %1526 = vmatprep.mubr.f32.mxu0 0.0
    %v1527 = vand.u32 %v1149, 4294901760
    %v1528 = vsub.f32 %v1149, %v1527
    %1529 = vmatmul.mubr.f32.gmra.mxu0 %v1528
    %v1530 = vpop.f32.mrf.mxu0
    %v1531 = vadd.f32 %v1409, %v1530
    %v1532 = vpop.f32.mrf.mxu0
    %1533 = vmatprep.mubr.f32.mxu0 0.0
    %v1534 = vand.u32 %v1152, 4294901760
    %v1535 = vsub.f32 %v1152, %v1534
    %1536 = vmatmul.mubr.f32.gmra.mxu0 %v1535
    %v1537 = vpop.f32.mrf.mxu0
    %v1538 = vadd.f32 %v1415, %v1537
    %v1539 = vpop.f32.mrf.mxu0
    %1540 = vdwg.mxu0
    %1541 = vmatprep.subr.mxu0 0.0
    %1542 = vmatpush1.msra.mxu0 0.0
    %1543 = vmatprep.subr.mxu0 0.0
    %1544 = vmatpush1.msra.mxu0 0.0
    %1545 = vmatprep.subr.mxu0 0.0
    %1546 = vmatpush1.msra.mxu0 0.0
    %1547 = vmatprep.subr.mxu0 0.0
    %1548 = vmatpush1.msra.mxu0 0.0
    %1549 = vmatprep.subr.mxu0 0.0
    %1550 = vmatpush1.msra.mxu0 0.0
    %1551 = vmatprep.subr.mxu0 0.0
    %1552 = vmatpush1.msra.mxu0 0.0
    %1553 = vmatprep.subr.mxu0 0.0
    %1554 = vmatpush1.msra.mxu0 0.0
    %1555 = vmatprep.subr.mxu0 0.0
    %1556 = vmatpush1.msra.mxu0 0.0
    %1557 = vmatprep.subr.mxu0 0.0
    %1558 = vmatpush1.msra.mxu0 0.0
    %1559 = vmatprep.subr.mxu0 0.0
    %1560 = vmatpush1.msra.mxu0 0.0
    %1561 = vmatprep.subr.mxu0 0.0
    %1562 = vmatpush1.msra.mxu0 0.0
    %1563 = vmatprep.subr.mxu0 0.0
    %1564 = vmatpush1.msra.mxu0 0.0
    %1565 = vmatprep.subr.mxu0 0.0
    %1566 = vmatpush1.msra.mxu0 0.0
    %1567 = vmatprep.subr.mxu0 0.0
    %1568 = vmatpush1.msra.mxu0 0.0
    %1569 = vmatprep.subr.mxu0 0.0
    %1570 = vmatpush1.msra.mxu0 0.0
    %1571 = vmatprep.subr.mxu0 0.0
    %v1572 = vand.u32 %v1129, 4294901760
    %1573 = vmatpush1.msra.mxu0 %v1572
    %1574 = vmatprep.subr.mxu0 0.0
    %1575 = vmatpush2.msra.mxu0 0.0
    %1576 = vmatprep.subr.mxu0 0.0
    %1577 = vmatpush2.msra.mxu0 0.0
    %1578 = vmatprep.subr.mxu0 0.0
    %1579 = vmatpush2.msra.mxu0 0.0
    %1580 = vmatprep.subr.mxu0 0.0
    %1581 = vmatpush2.msra.mxu0 0.0
    %1582 = vmatprep.subr.mxu0 0.0
    %1583 = vmatpush2.msra.mxu0 0.0
    %1584 = vmatprep.subr.mxu0 0.0
    %1585 = vmatpush2.msra.mxu0 0.0
    %1586 = vmatprep.subr.mxu0 0.0
    %1587 = vmatpush2.msra.mxu0 0.0
    %1588 = vmatprep.subr.mxu0 0.0
    %1589 = vmatpush2.msra.mxu0 0.0
    %1590 = vmatprep.subr.mxu0 0.0
    %1591 = vmatpush2.msra.mxu0 0.0
    %1592 = vmatprep.subr.mxu0 0.0
    %1593 = vmatpush2.msra.mxu0 0.0
    %1594 = vmatprep.subr.mxu0 0.0
    %1595 = vmatpush2.msra.mxu0 0.0
    %1596 = vmatprep.subr.mxu0 0.0
    %1597 = vmatpush2.msra.mxu0 0.0
    %1598 = vmatprep.subr.mxu0 0.0
    %1599 = vmatpush2.msra.mxu0 0.0
    %1600 = vmatprep.subr.mxu0 0.0
    %1601 = vmatpush2.msra.mxu0 0.0
    %1602 = vmatprep.subr.mxu0 0.0
    %1603 = vmatpush2.msra.mxu0 0.0
    %1604 = vmatprep.subr.mxu0 0.0
    %1605 = vmatpush2.msra.mxu0 0.0
    %1606 = vmatprep.mubr.f32.mxu0 0.0
    %v1607 = vand.u32 %v1131, 4294901760
    %v1608 = vsub.f32 %v1131, %v1607
    %v1609 = vand.u32 %v1608, 4294901760
    %1610 = vmatmul.mubr.f32.gmra.mxu0 %v1609
    %v1611 = vpop.f32.mrf.mxu0
    %v1612 = vadd.f32 %v1489, %v1611
    %v1613 = vpop.f32.mrf.mxu0
    %1614 = vmatprep.mubr.f32.mxu0 0.0
    %v1615 = vand.u32 %v1134, 4294901760
    %v1616 = vsub.f32 %v1134, %v1615
    %v1617 = vand.u32 %v1616, 4294901760
    %1618 = vmatmul.mubr.f32.gmra.mxu0 %v1617
    %v1619 = vpop.f32.mrf.mxu0
    %v1620 = vadd.f32 %v1496, %v1619
    %v1621 = vpop.f32.mrf.mxu0
    %1622 = vmatprep.mubr.f32.mxu0 0.0
    %v1623 = vand.u32 %v1137, 4294901760
    %v1624 = vsub.f32 %v1137, %v1623
    %v1625 = vand.u32 %v1624, 4294901760
    %1626 = vmatmul.mubr.f32.gmra.mxu0 %v1625
    %v1627 = vpop.f32.mrf.mxu0
    %v1628 = vadd.f32 %v1503, %v1627
    %v1629 = vpop.f32.mrf.mxu0
    %1630 = vmatprep.mubr.f32.mxu0 0.0
    %v1631 = vand.u32 %v1140, 4294901760
    %v1632 = vsub.f32 %v1140, %v1631
    %v1633 = vand.u32 %v1632, 4294901760
    %1634 = vmatmul.mubr.f32.gmra.mxu0 %v1633
    %v1635 = vpop.f32.mrf.mxu0
    %v1636 = vadd.f32 %v1510, %v1635
    %v1637 = vpop.f32.mrf.mxu0
    %1638 = vmatprep.mubr.f32.mxu0 0.0
    %v1639 = vand.u32 %v1143, 4294901760
    %v1640 = vsub.f32 %v1143, %v1639
    %v1641 = vand.u32 %v1640, 4294901760
    %1642 = vmatmul.mubr.f32.gmra.mxu0 %v1641
    %v1643 = vpop.f32.mrf.mxu0
    %v1644 = vadd.f32 %v1517, %v1643
    %v1645 = vpop.f32.mrf.mxu0
    %1646 = vmatprep.mubr.f32.mxu0 0.0
    %v1647 = vand.u32 %v1146, 4294901760
    %v1648 = vsub.f32 %v1146, %v1647
    %v1649 = vand.u32 %v1648, 4294901760
    %1650 = vmatmul.mubr.f32.gmra.mxu0 %v1649
    %v1651 = vpop.f32.mrf.mxu0
    %v1652 = vadd.f32 %v1524, %v1651
    %v1653 = vpop.f32.mrf.mxu0
    %1654 = vmatprep.mubr.f32.mxu0 0.0
    %v1655 = vand.u32 %v1149, 4294901760
    %v1656 = vsub.f32 %v1149, %v1655
    %v1657 = vand.u32 %v1656, 4294901760
    %1658 = vmatmul.mubr.f32.gmra.mxu0 %v1657
    %v1659 = vpop.f32.mrf.mxu0
    %v1660 = vadd.f32 %v1531, %v1659
    %v1661 = vpop.f32.mrf.mxu0
    %1662 = vmatprep.mubr.f32.mxu0 0.0
    %v1663 = vand.u32 %v1152, 4294901760
    %v1664 = vsub.f32 %v1152, %v1663
    %v1665 = vand.u32 %v1664, 4294901760
    %1666 = vmatmul.mubr.f32.gmra.mxu0 %v1665
    %v1667 = vpop.f32.mrf.mxu0
    %v1668 = vadd.f32 %v1538, %v1667
    %v1669 = vpop.f32.mrf.mxu0
    %1670 = vdwg.mxu0
    %1671 = vmatprep.subr.mxu0 0.0
    %1672 = vmatpush1.msra.mxu0 0.0
    %1673 = vmatprep.subr.mxu0 0.0
    %1674 = vmatpush1.msra.mxu0 0.0
    %1675 = vmatprep.subr.mxu0 0.0
    %1676 = vmatpush1.msra.mxu0 0.0
    %1677 = vmatprep.subr.mxu0 0.0
    %1678 = vmatpush1.msra.mxu0 0.0
    %1679 = vmatprep.subr.mxu0 0.0
    %1680 = vmatpush1.msra.mxu0 0.0
    %1681 = vmatprep.subr.mxu0 0.0
    %1682 = vmatpush1.msra.mxu0 0.0
    %1683 = vmatprep.subr.mxu0 0.0
    %1684 = vmatpush1.msra.mxu0 0.0
    %1685 = vmatprep.subr.mxu0 0.0
    %1686 = vmatpush1.msra.mxu0 0.0
    %1687 = vmatprep.subr.mxu0 0.0
    %1688 = vmatpush1.msra.mxu0 0.0
    %1689 = vmatprep.subr.mxu0 0.0
    %1690 = vmatpush1.msra.mxu0 0.0
    %1691 = vmatprep.subr.mxu0 0.0
    %1692 = vmatpush1.msra.mxu0 0.0
    %1693 = vmatprep.subr.mxu0 0.0
    %1694 = vmatpush1.msra.mxu0 0.0
    %1695 = vmatprep.subr.mxu0 0.0
    %1696 = vmatpush1.msra.mxu0 0.0
    %1697 = vmatprep.subr.mxu0 0.0
    %1698 = vmatpush1.msra.mxu0 0.0
    %1699 = vmatprep.subr.mxu0 0.0
    %1700 = vmatpush1.msra.mxu0 0.0
    %1701 = vmatprep.subr.mxu0 0.0
    %v1702 = vand.u32 %v1129, 4294901760
    %v1703 = vsub.f32 %v1129, %v1702
    %v1704 = vand.u32 %v1703, 4294901760
    %1705 = vmatpush1.msra.mxu0 %v1704
    %1706 = vmatprep.subr.mxu0 0.0
    %1707 = vmatpush2.msra.mxu0 0.0
    %1708 = vmatprep.subr.mxu0 0.0
    %1709 = vmatpush2.msra.mxu0 0.0
    %1710 = vmatprep.subr.mxu0 0.0
    %1711 = vmatpush2.msra.mxu0 0.0
    %1712 = vmatprep.subr.mxu0 0.0
    %1713 = vmatpush2.msra.mxu0 0.0
    %1714 = vmatprep.subr.mxu0 0.0
    %1715 = vmatpush2.msra.mxu0 0.0
    %1716 = vmatprep.subr.mxu0 0.0
    %1717 = vmatpush2.msra.mxu0 0.0
    %1718 = vmatprep.subr.mxu0 0.0
    %1719 = vmatpush2.msra.mxu0 0.0
    %1720 = vmatprep.subr.mxu0 0.0
    %1721 = vmatpush2.msra.mxu0 0.0
    %1722 = vmatprep.subr.mxu0 0.0
    %1723 = vmatpush2.msra.mxu0 0.0
    %1724 = vmatprep.subr.mxu0 0.0
    %1725 = vmatpush2.msra.mxu0 0.0
    %1726 = vmatprep.subr.mxu0 0.0
    %1727 = vmatpush2.msra.mxu0 0.0
    %1728 = vmatprep.subr.mxu0 0.0
    %1729 = vmatpush2.msra.mxu0 0.0
    %1730 = vmatprep.subr.mxu0 0.0
    %1731 = vmatpush2.msra.mxu0 0.0
    %1732 = vmatprep.subr.mxu0 0.0
    %1733 = vmatpush2.msra.mxu0 0.0
    %1734 = vmatprep.subr.mxu0 0.0
    %1735 = vmatpush2.msra.mxu0 0.0
    %1736 = vmatprep.subr.mxu0 0.0
    %1737 = vmatpush2.msra.mxu0 0.0
    %1738 = vmatprep.mubr.f32.mxu0 0.0
    %v1739 = vand.u32 %v1131, 4294901760
    %1740 = vmatmul.mubr.f32.gmra.mxu0 %v1739
    %v1741 = vpop.f32.mrf.mxu0
    %v1742 = vadd.f32 %v1612, %v1741
    %v1743 = vpop.f32.mrf.mxu0
    %1744 = vmatprep.mubr.f32.mxu0 0.0
    %v1745 = vand.u32 %v1134, 4294901760
    %1746 = vmatmul.mubr.f32.gmra.mxu0 %v1745
    %v1747 = vpop.f32.mrf.mxu0
    %v1748 = vadd.f32 %v1620, %v1747
    %v1749 = vpop.f32.mrf.mxu0
    %1750 = vmatprep.mubr.f32.mxu0 0.0
    %v1751 = vand.u32 %v1137, 4294901760
    %1752 = vmatmul.mubr.f32.gmra.mxu0 %v1751
    %v1753 = vpop.f32.mrf.mxu0
    %v1754 = vadd.f32 %v1628, %v1753
    %v1755 = vpop.f32.mrf.mxu0
    %1756 = vmatprep.mubr.f32.mxu0 0.0
    %v1757 = vand.u32 %v1140, 4294901760
    %1758 = vmatmul.mubr.f32.gmra.mxu0 %v1757
    %v1759 = vpop.f32.mrf.mxu0
    %v1760 = vadd.f32 %v1636, %v1759
    %v1761 = vpop.f32.mrf.mxu0
    %1762 = vmatprep.mubr.f32.mxu0 0.0
    %v1763 = vand.u32 %v1143, 4294901760
    %1764 = vmatmul.mubr.f32.gmra.mxu0 %v1763
    %v1765 = vpop.f32.mrf.mxu0
    %v1766 = vadd.f32 %v1644, %v1765
    %v1767 = vpop.f32.mrf.mxu0
    %1768 = vmatprep.mubr.f32.mxu0 0.0
    %v1769 = vand.u32 %v1146, 4294901760
    %1770 = vmatmul.mubr.f32.gmra.mxu0 %v1769
    %v1771 = vpop.f32.mrf.mxu0
    %v1772 = vadd.f32 %v1652, %v1771
    %v1773 = vpop.f32.mrf.mxu0
    %1774 = vmatprep.mubr.f32.mxu0 0.0
    %v1775 = vand.u32 %v1149, 4294901760
    %1776 = vmatmul.mubr.f32.gmra.mxu0 %v1775
    %v1777 = vpop.f32.mrf.mxu0
    %v1778 = vadd.f32 %v1660, %v1777
    %v1779 = vpop.f32.mrf.mxu0
    %1780 = vmatprep.mubr.f32.mxu0 0.0
    %v1781 = vand.u32 %v1152, 4294901760
    %1782 = vmatmul.mubr.f32.gmra.mxu0 %v1781
    %v1783 = vpop.f32.mrf.mxu0
    %v1784 = vadd.f32 %v1668, %v1783
    %v1785 = vpop.f32.mrf.mxu0
    %1786 = vdwg.mxu0
    %1787 = vmatprep.subr.mxu0 0.0
    %1788 = vmatpush1.msra.mxu0 0.0
    %1789 = vmatprep.subr.mxu0 0.0
    %1790 = vmatpush1.msra.mxu0 0.0
    %1791 = vmatprep.subr.mxu0 0.0
    %1792 = vmatpush1.msra.mxu0 0.0
    %1793 = vmatprep.subr.mxu0 0.0
    %1794 = vmatpush1.msra.mxu0 0.0
    %1795 = vmatprep.subr.mxu0 0.0
    %1796 = vmatpush1.msra.mxu0 0.0
    %1797 = vmatprep.subr.mxu0 0.0
    %1798 = vmatpush1.msra.mxu0 0.0
    %1799 = vmatprep.subr.mxu0 0.0
    %1800 = vmatpush1.msra.mxu0 0.0
    %1801 = vmatprep.subr.mxu0 0.0
    %1802 = vmatpush1.msra.mxu0 0.0
    %1803 = vmatprep.subr.mxu0 0.0
    %1804 = vmatpush1.msra.mxu0 0.0
    %1805 = vmatprep.subr.mxu0 0.0
    %1806 = vmatpush1.msra.mxu0 0.0
    %1807 = vmatprep.subr.mxu0 0.0
    %1808 = vmatpush1.msra.mxu0 0.0
    %1809 = vmatprep.subr.mxu0 0.0
    %1810 = vmatpush1.msra.mxu0 0.0
    %1811 = vmatprep.subr.mxu0 0.0
    %1812 = vmatpush1.msra.mxu0 0.0
    %1813 = vmatprep.subr.mxu0 0.0
    %1814 = vmatpush1.msra.mxu0 0.0
    %1815 = vmatprep.subr.mxu0 0.0
    %1816 = vmatpush1.msra.mxu0 0.0
    %1817 = vmatprep.subr.mxu0 0.0
    %v1818 = vand.u32 %v1129, 4294901760
    %1819 = vmatpush1.msra.mxu0 %v1818
    %1820 = vmatprep.subr.mxu0 0.0
    %1821 = vmatpush2.msra.mxu0 0.0
    %1822 = vmatprep.subr.mxu0 0.0
    %1823 = vmatpush2.msra.mxu0 0.0
    %1824 = vmatprep.subr.mxu0 0.0
    %1825 = vmatpush2.msra.mxu0 0.0
    %1826 = vmatprep.subr.mxu0 0.0
    %1827 = vmatpush2.msra.mxu0 0.0
    %1828 = vmatprep.subr.mxu0 0.0
    %1829 = vmatpush2.msra.mxu0 0.0
    %1830 = vmatprep.subr.mxu0 0.0
    %1831 = vmatpush2.msra.mxu0 0.0
    %1832 = vmatprep.subr.mxu0 0.0
    %1833 = vmatpush2.msra.mxu0 0.0
    %1834 = vmatprep.subr.mxu0 0.0
    %1835 = vmatpush2.msra.mxu0 0.0
    %1836 = vmatprep.subr.mxu0 0.0
    %1837 = vmatpush2.msra.mxu0 0.0
    %1838 = vmatprep.subr.mxu0 0.0
    %1839 = vmatpush2.msra.mxu0 0.0
    %1840 = vmatprep.subr.mxu0 0.0
    %1841 = vmatpush2.msra.mxu0 0.0
    %1842 = vmatprep.subr.mxu0 0.0
    %1843 = vmatpush2.msra.mxu0 0.0
    %1844 = vmatprep.subr.mxu0 0.0
    %1845 = vmatpush2.msra.mxu0 0.0
    %1846 = vmatprep.subr.mxu0 0.0
    %1847 = vmatpush2.msra.mxu0 0.0
    %1848 = vmatprep.subr.mxu0 0.0
    %1849 = vmatpush2.msra.mxu0 0.0
    %1850 = vmatprep.subr.mxu0 0.0
    %1851 = vmatpush2.msra.mxu0 0.0
    %1852 = vmatprep.mubr.f32.mxu0 0.0
    %v1853 = vand.u32 %v1131, 4294901760
    %1854 = vmatmul.mubr.f32.gmra.mxu0 %v1853
    %v1855 = vpop.f32.mrf.mxu0
    %v1856 = vadd.f32 %v1742, %v1855
    %v1857 = vpop.f32.mrf.mxu0
    %1858 = vmatprep.mubr.f32.mxu0 0.0
    %v1859 = vand.u32 %v1134, 4294901760
    %1860 = vmatmul.mubr.f32.gmra.mxu0 %v1859
    %v1861 = vpop.f32.mrf.mxu0
    %v1862 = vadd.f32 %v1748, %v1861
    %v1863 = vpop.f32.mrf.mxu0
    %1864 = vmatprep.mubr.f32.mxu0 0.0
    %v1865 = vand.u32 %v1137, 4294901760
    %1866 = vmatmul.mubr.f32.gmra.mxu0 %v1865
    %v1867 = vpop.f32.mrf.mxu0
    %v1868 = vadd.f32 %v1754, %v1867
    %v1869 = vpop.f32.mrf.mxu0
    %1870 = vmatprep.mubr.f32.mxu0 0.0
    %v1871 = vand.u32 %v1140, 4294901760
    %1872 = vmatmul.mubr.f32.gmra.mxu0 %v1871
    %v1873 = vpop.f32.mrf.mxu0
    %v1874 = vadd.f32 %v1760, %v1873
    %v1875 = vpop.f32.mrf.mxu0
    %1876 = vmatprep.mubr.f32.mxu0 0.0
    %v1877 = vand.u32 %v1143, 4294901760
    %1878 = vmatmul.mubr.f32.gmra.mxu0 %v1877
    %v1879 = vpop.f32.mrf.mxu0
    %v1880 = vadd.f32 %v1766, %v1879
    %v1881 = vpop.f32.mrf.mxu0
    %1882 = vmatprep.mubr.f32.mxu0 0.0
    %v1883 = vand.u32 %v1146, 4294901760
    %1884 = vmatmul.mubr.f32.gmra.mxu0 %v1883
    %v1885 = vpop.f32.mrf.mxu0
    %v1886 = vadd.f32 %v1772, %v1885
    %v1887 = vpop.f32.mrf.mxu0
    %1888 = vmatprep.mubr.f32.mxu0 0.0
    %v1889 = vand.u32 %v1149, 4294901760
    %1890 = vmatmul.mubr.f32.gmra.mxu0 %v1889
    %v1891 = vpop.f32.mrf.mxu0
    %v1892 = vadd.f32 %v1778, %v1891
    %v1893 = vpop.f32.mrf.mxu0
    %1894 = vmatprep.mubr.f32.mxu0 0.0
    %v1895 = vand.u32 %v1152, 4294901760
    %1896 = vmatmul.mubr.f32.gmra.mxu0 %v1895
    %v1897 = vpop.f32.mrf.mxu0
    %v1898 = vadd.f32 %v1784, %v1897
    %v1899 = vpop.f32.mrf.mxu0
    %1900 = vdwg.mxu0
    %v1901 = vlaneseq
    %v1902 = vand.u32 %v1901, 127
    %v1903 = vcvt.s32.f32 %v1902
    %v1904 = vld [vmem:[#allocation2] sm:$0xff]
    %v1905 = vld [vmem:[#allocation2 + $0x8] sm:$0xff]
    %v1906 = vld [vmem:[#allocation2 + $0x10] sm:$0xff]
    %v1907 = vld [vmem:[#allocation2 + $0x18] sm:$0xff]
    %v1908 = vld [vmem:[#allocation2 + $0x20] sm:$0xff]
    %v1909 = vld [vmem:[#allocation2 + $0x28] sm:$0xff]
    %v1910 = vld [vmem:[#allocation2 + $0x30] sm:$0xff]
    %v1911 = vld [vmem:[#allocation2 + $0x38] sm:$0xff]
    %vm1912 = vcmp.eq.f32.partialorder %v1903, %v1856
    %vm1913 = vcmp.eq.f32.partialorder %v1903, %v1862
    %vm1914 = vcmp.eq.f32.partialorder %v1903, %v1868
    %vm1915 = vcmp.eq.f32.partialorder %v1903, %v1874
    %vm1916 = vcmp.eq.f32.partialorder %v1903, %v1880
    %vm1917 = vcmp.eq.f32.partialorder %v1903, %v1886
    %vm1918 = vcmp.eq.f32.partialorder %v1903, %v1892
    %vm1919 = vcmp.eq.f32.partialorder %v1903, %v1898
    %v1920 = vsel %vm1912, %v42, 0.0
    %v1921 = vsel %vm1913, %v43, 0.0
    %v1922 = vsel %vm1914, %v44, 0.0
    %v1923 = vsel %vm1915, %v45, 0.0
    %v1924 = vsel %vm1916, %v46, 0.0
    %v1925 = vsel %vm1917, %v47, 0.0
    %v1926 = vsel %vm1918, %v48, 0.0
    %v1927 = vsel %vm1919, %v49, 0.0
    %v1928 = vadd.f32 %v1904, %v1920
    %v1929 = vadd.f32 %v1905, %v1921
    %v1930 = vadd.f32 %v1906, %v1922
    %v1931 = vadd.f32 %v1907, %v1923
    %v1932 = vadd.f32 %v1908, %v1924
    %v1933 = vadd.f32 %v1909, %v1925
    %v1934 = vadd.f32 %v1910, %v1926
    %v1935 = vadd.f32 %v1911, %v1927
    %1936 = vst [vmem:[#allocation2] sm:$0xff] %v1928
    %1937 = vst [vmem:[#allocation2 + $0x8] sm:$0xff] %v1929
    %1938 = vst [vmem:[#allocation2 + $0x10] sm:$0xff] %v1930
    %1939 = vst [vmem:[#allocation2 + $0x18] sm:$0xff] %v1931
    %1940 = vst [vmem:[#allocation2 + $0x20] sm:$0xff] %v1932
    %1941 = vst [vmem:[#allocation2 + $0x28] sm:$0xff] %v1933
    %1942 = vst [vmem:[#allocation2 + $0x30] sm:$0xff] %v1934
    %1943 = vst [vmem:[#allocation2 + $0x38] sm:$0xff] %v1935
    // Predicated region
    $region22: #{tpu_custom_call.1} parent=1 // pred_check
      %p1944 = pneg %p21
    $region23: #{tpu_custom_call.1} parent=1 // pred_check_branch
      %1946 = sbr.rel (%p1944) target = $region25
    $region24: #{tpu_custom_call.1} parent=1 // pred_region
      %v1947 = vld [vmem:[#allocation2] sm:$0xff]
      %v1948 = vld [vmem:[#allocation2 + $0x8] sm:$0xff]
      %v1949 = vld [vmem:[#allocation2 + $0x10] sm:$0xff]
      %v1950 = vld [vmem:[#allocation2 + $0x18] sm:$0xff]
      %v1951 = vld [vmem:[#allocation2 + $0x20] sm:$0xff]
      %v1952 = vld [vmem:[#allocation2 + $0x28] sm:$0xff]
      %v1953 = vld [vmem:[#allocation2 + $0x30] sm:$0xff]
      %v1954 = vld [vmem:[#allocation2 + $0x38] sm:$0xff]
      %v1955 = vadd.f32 %v1947, %v1948
      %v1956 = vadd.f32 %v1955, %v1949
      %v1957 = vadd.f32 %v1956, %v1950
      %v1958 = vadd.f32 %v1957, %v1951
      %v1959 = vadd.f32 %v1958, %v1952
      %v1960 = vadd.f32 %v1959, %v1953
      %v1961 = vadd.f32 %v1960, %v1954
      %v1962 = vrot.slane %v1961, 4
      %v1963 = vadd.f32 %v1961, %v1962
      %v1964 = vrot.slane %v1963, 2
      %v1965 = vadd.f32 %v1963, %v1964
      %v1966 = vrot.slane %v1965, 1
      %v1967 = vadd.f32 %v1965, %v1966
      %1968 = vst [vmem:[#allocation4] sm:$0x1] %v1967
      %v1969 = vld [vmem:[#allocation3] sm:$0xff]
      %v1970 = vld [vmem:[#allocation3 + $0x8] sm:$0xff]
      %v1971 = vld [vmem:[#allocation3 + $0x10] sm:$0xff]
      %v1972 = vld [vmem:[#allocation3 + $0x18] sm:$0xff]
      %v1973 = vld [vmem:[#allocation3 + $0x20] sm:$0xff]
      %v1974 = vld [vmem:[#allocation3 + $0x28] sm:$0xff]
      %v1975 = vld [vmem:[#allocation3 + $0x30] sm:$0xff]
      %v1976 = vld [vmem:[#allocation3 + $0x38] sm:$0xff]
      %v1977 = vsel %vm1120, %v1969, 0.0
      %v1978 = vsel %vm1120, %v1970, 0.0
      %v1979 = vadd.f32 %v1977, %v1978
      %v1980 = vsel %vm1120, %v1971, 0.0
      %v1981 = vadd.f32 %v1979, %v1980
      %v1982 = vsel %vm1120, %v1972, 0.0
      %v1983 = vadd.f32 %v1981, %v1982
      %v1984 = vsel %vm1120, %v1973, 0.0
      %v1985 = vadd.f32 %v1983, %v1984
      %v1986 = vsel %vm1120, %v1974, 0.0
      %v1987 = vadd.f32 %v1985, %v1986
      %v1988 = vsel %vm1120, %v1975, 0.0
      %v1989 = vadd.f32 %v1987, %v1988
      %v1990 = vsel %vm1120, %v1976, 0.0
      %v1991 = vadd.f32 %v1989, %v1990
      %v1992 = vrot.slane %v1991, 4
      %v1993 = vadd.f32 %v1991, %v1992
      %v1994 = vrot.slane %v1993, 2
      %v1995 = vadd.f32 %v1993, %v1994
      %v1996 = vrot.slane %v1995, 1
      %v1997 = vadd.f32 %v1995, %v1996
      %vm1998 = vcmask 57344
      %1999 = vst.msk [vmem:[#allocation6] sm:$0x1] %vm1998, %v1997
    $region25: #{tpu_custom_call.1} parent=1 // pred_fallthru
      _
    // Predicated region
    $region26: #{tpu_custom_call.1} parent=1 // pred_check
      _
    $region27: #{tpu_custom_call.1} parent=1 // pred_check_branch
      %2001 = sbr.rel (0) target = $region29
    $region28: #{tpu_custom_call.1} parent=1 // pred_region
      %s2003 = ssub.s32 16, 16
      %2004 = vsyncadd [#allocation5], %s2003
      %s2006 = sshll.u32 [#allocation4], 4
      %s2007 = int_to_ptr.vmem [resolvable:$true] %s2006
      %2009 = dma.vmem_to_hbm [thread:$0]  %s2007, 16, %s4, [#allocation5]
    $region29: #{tpu_custom_call.1} parent=1 // pred_fallthru
      _
    // Predicated region
    $region30: #{tpu_custom_call.1} parent=1 // pred_check
      _
    $region31: #{tpu_custom_call.1} parent=1 // pred_check_branch
      %2011 = sbr.rel (0) target = $region33
    $region32: #{tpu_custom_call.1} parent=1 // pred_region
      %s2013 = ssub.s32 16, 16
      %2014 = vsyncadd [#allocation7], %s2013
      %s2016 = sshll.u32 [#allocation6], 4
      %s2017 = int_to_ptr.vmem [resolvable:$true] %s2016
      %2019 = dma.vmem_to_hbm [thread:$0]  %s2017, 16, %s5, [#allocation7]
    $region33: #{tpu_custom_call.1} parent=1 // pred_fallthru
      _
    // Predicated region
    $region34: #{tpu_custom_call.1} parent=1 // pred_check
      _
    $region35: #{tpu_custom_call.1} parent=1 // pred_check_branch
      %2021 = sbr.rel (0) target = $region37
    $region36: #{tpu_custom_call.1} parent=1 // pred_region
      %2022 = dma.done [#allocation5], 16
    $region37: #{tpu_custom_call.1} parent=1 // pred_fallthru
      _
    // Predicated region
    $region38: #{tpu_custom_call.1} parent=1 // pred_check
      _
    $region39: #{tpu_custom_call.1} parent=1 // pred_check_branch
      %2024 = sbr.rel (0) target = $region41
    $region40: #{tpu_custom_call.1} parent=1 // pred_region
      %2025 = dma.done [#allocation7], 16
    $region41: #{tpu_custom_call.1} parent=1 // pred_fallthru
      _
    %2026 = vsyncpa [#allocation5], 1
    %2027 = vsyncpa [#allocation7], 1

</llo_original>
